<compile_context>
chip_gen: v5e
topology: v5e:2x2
jax: 0.10.0
libtpu: 0.0.40
codegen_flags: <defaults>
</compile_context>

<pallas_src>
import functools

import jax
import jax.numpy as jnp
from jax.experimental import pallas as pl
from jax.experimental.pallas import tpu as pltpu

_HIDDEN = 16
_N_DROP_LAYERS = 3


def _mlp_stack(x, w1_ref, b1_ref, w2_ref, b2_ref, w3_ref, b3_ref,
               w4_ref, b4_ref, dropout):
    """Shared 4-layer forward for one batch tile (f32 accumulation)."""
    h = jnp.dot(x, w1_ref[...], preferred_element_type=jnp.float32) + b1_ref[...]
    h = dropout(jnp.maximum(h, 0.0), 0)
    h = jnp.dot(h, w2_ref[...], preferred_element_type=jnp.float32) + b2_ref[...]
    h = dropout(jnp.maximum(h, 0.0), 1)
    h = jnp.dot(h, w3_ref[...], preferred_element_type=jnp.float32) + b3_ref[...]
    h = dropout(jnp.maximum(h, 0.0), 2)
    return jnp.dot(h, w4_ref[...], preferred_element_type=jnp.float32) + b4_ref[...]


def _mlp_eval_kernel(x_ref, w1_ref, b1_ref, w2_ref, b2_ref, w3_ref, b3_ref,
                     w4_ref, b4_ref, o_ref):
    x = x_ref[...].astype(jnp.float32)
    out = _mlp_stack(x, w1_ref, b1_ref, w2_ref, b2_ref, w3_ref, b3_ref,
                     w4_ref, b4_ref, dropout=lambda h, layer: h)
    o_ref[...] = out.astype(o_ref.dtype)


def _mlp_train_kernel(x_ref, bits_ref, w1_ref, b1_ref, w2_ref, b2_ref,
                      w3_ref, b3_ref, w4_ref, b4_ref, o_ref, *, p: float):
    # Integer-threshold inverted dropout: drop iff bits < p * 2^32, else scale.
    thresh = jnp.uint32(min(int(p * (2 ** 32)), 2 ** 32 - 1))
    scale = jnp.float32(1.0 / (1.0 - p))
    bits = bits_ref[...]  # (tb, 3*16) uint32, one draw per hidden unit per layer

    def dropout(h, layer):
        b = bits[:, layer * _HIDDEN:(layer + 1) * _HIDDEN]
        return jnp.where(b >= thresh, h * scale, jnp.float32(0.0))

    x = x_ref[...].astype(jnp.float32)
    out = _mlp_stack(x, w1_ref, b1_ref, w2_ref, b2_ref, w3_ref, b3_ref,
                     w4_ref, b4_ref, dropout=dropout)
    o_ref[...] = out.astype(o_ref.dtype)


def _choose_batch_tile(n, n_input, batch_tile, training):
    """Pick a batch tile that is a multiple of 8 and keeps the double-buffered
    per-step streamed footprint small (safe on v5e/v6e/v7x scoped-VMEM defaults)."""
    row_bytes = n_input * 4 + (_N_DROP_LAYERS * _HIDDEN * 4 if training else 0)
    vmem_budget = 8 * 1024 * 1024          # per-step streamed budget (x2 for dbl-buf)
    tb_cap = max(8, (vmem_budget // (2 * row_bytes)) // 8 * 8)
    tb = min(batch_tile, n, tb_cap)
    if tb < n:
        tb = max(8, (tb // 8) * 8)          # (8,128) sublane rule when tiling
    return tb


def mlp_net4_drop(x, params, *, p=0.2, training=False, seed=0, batch_tile=1024):
    """Pallas forward of MLPNet4Drop.

    params: PyTorch-layout weights
       w1:(16,n_in) b1:(16,) w2:(16,16) b2:(16,) w3:(16,16) b3:(16,)
       w4:(n_classes,16) b4:(n_classes,)
    training=False reproduces model.eval() (dropout = identity).
    training=True applies inverted dropout with bits drawn from jax.random
    (deterministic given `seed`; it cannot bit-match torch's RNG stream).
    """
    n, n_input = x.shape
    n_classes = params["w4"].shape[0]

    tb = _choose_batch_tile(n, n_input, batch_tile, training)
    n_pad = pl.cdiv(n, tb) * tb
    if n_pad != n:
        x = jnp.pad(x, ((0, n_pad - n), (0, 0)))

    # glue: weights to (in, out); biases to (1, out) so they are 2-D in VMEM
    w1 = params["w1"].T
    w2 = params["w2"].T
    w3 = params["w3"].T
    w4 = params["w4"].T
    b1 = params["b1"].reshape(1, -1)
    b2 = params["b2"].reshape(1, -1)
    b3 = params["b3"].reshape(1, -1)
    b4 = params["b4"].reshape(1, -1)

    grid = (n_pad // tb,)

    def resident(a):
        # Constant index_map: fetched once, stays resident in VMEM across the grid.
        return pl.BlockSpec(a.shape, lambda i: (0,) * a.ndim)

    x_spec = pl.BlockSpec((tb, n_input), lambda i: (i, 0))
    weight_specs = [resident(w1), resident(b1), resident(w2), resident(b2),
                    resident(w3), resident(b3), resident(w4), resident(b4)]
    out_spec = pl.BlockSpec((tb, n_classes), lambda i: (i, 0))

    if training and p > 0.0:
        key = jax.random.PRNGKey(seed)
        bits = jax.random.bits(key, (n_pad, _N_DROP_LAYERS * _HIDDEN), jnp.uint32)
        kernel = functools.partial(_mlp_train_kernel, p=float(p))
        in_specs = [x_spec,
                    pl.BlockSpec((tb, _N_DROP_LAYERS * _HIDDEN), lambda i: (i, 0)),
                    *weight_specs]
        args = (x, bits, w1, b1, w2, b2, w3, b3, w4, b4)
    else:
        kernel = _mlp_eval_kernel
        in_specs = [x_spec, *weight_specs]
        args = (x, w1, b1, w2, b2, w3, b3, w4, b4)

    grid_spec = pltpu.PrefetchScalarGridSpec(
        num_scalar_prefetch=0,
        grid=grid,
        in_specs=in_specs,
        out_specs=out_spec,
    )

    out = pl.pallas_call(
        kernel,
        out_shape=jax.ShapeDtypeStruct((n_pad, n_classes), x.dtype),
        grid_spec=grid_spec,
        compiler_params=pltpu.CompilerParams(
            dimension_semantics=("parallel",)),  # batch tiles independent -> both v7x TCs
    )(*args)

    return out[:n]


def init_params(key, n_input, n_classes):
    """Deterministic init mirroring nn.Linear default (U[-1/sqrt(fan_in), 1/sqrt(fan_in)])."""
    def linear(k, fan_in, fan_out):
        kw, kb = jax.random.split(k)
        bound = 1.0 / jnp.sqrt(jnp.float32(fan_in))
        w = jax.random.uniform(kw, (fan_out, fan_in), jnp.float32, -bound, bound)
        b = jax.random.uniform(kb, (fan_out,), jnp.float32, -bound, bound)
        return w, b

    k1, k2, k3, k4 = jax.random.split(key, 4)
    w1, b1 = linear(k1, n_input, _HIDDEN)
    w2, b2 = linear(k2, _HIDDEN, _HIDDEN)
    w3, b3 = linear(k3, _HIDDEN, _HIDDEN)
    w4, b4 = linear(k4, _HIDDEN, n_classes)
    return dict(w1=w1, b1=b1, w2=w2, b2=b2, w3=w3, b3=b3, w4=w4, b4=b4)


def _reference_eval(x, params):
    h = jnp.maximum(x @ params["w1"].T + params["b1"], 0.0)
    h = jnp.maximum(h @ params["w2"].T + params["b2"], 0.0)
    h = jnp.maximum(h @ params["w3"].T + params["b3"], 0.0)
    return h @ params["w4"].T + params["b4"]


if __name__ == "__main__":
    key = jax.random.PRNGKey(0)
    k_x, k_p = jax.random.split(key)

    batch, n_input, n_classes = 512, 32, 4
    x = jax.random.normal(k_x, (batch, n_input), jnp.float32)
    params = init_params(k_p, n_input, n_classes)

    # eval-mode forward (dropout = identity), check against pure-JAX reference
    out = mlp_net4_drop(x, params, p=0.2, training=False)
    out = jax.block_until_ready(out)
    ref = _reference_eval(x, params)
    assert out.shape == (batch, n_classes)
    assert jnp.allclose(out, ref, atol=1e-5, rtol=1e-5), "mismatch vs reference"

    # train-mode forward (inverted dropout, bits precomputed with jax.random)
    out_tr = mlp_net4_drop(x, params, p=0.2, training=True, seed=123)
    out_tr = jax.block_until_ready(out_tr)
    assert out_tr.shape == (batch, n_classes)
    assert bool(jnp.all(jnp.isfinite(out_tr)))

    print("KERNEL_OK")
</pallas_src>

<mosaic_0001>
module attributes {stable_mosaic.version = 11 : i64} {
  func.func @_mlp_eval_kernel(%arg0: i32, %arg1: memref<512x32xf32, #tpu.memory_space<vmem>>, %arg2: memref<32x16xf32, #tpu.memory_space<vmem>>, %arg3: memref<1x16xf32, #tpu.memory_space<vmem>>, %arg4: memref<16x16xf32, #tpu.memory_space<vmem>>, %arg5: memref<1x16xf32, #tpu.memory_space<vmem>>, %arg6: memref<16x16xf32, #tpu.memory_space<vmem>>, %arg7: memref<1x16xf32, #tpu.memory_space<vmem>>, %arg8: memref<16x4xf32, #tpu.memory_space<vmem>>, %arg9: memref<1x4xf32, #tpu.memory_space<vmem>>, %arg10: memref<512x4xf32, #tpu.memory_space<vmem>>) attributes {dimension_semantics = [#tpu.dimension_semantics<parallel>], iteration_bounds = array<i64: 1>, scalar_prefetch = 0 : i64, scratch_operands = 0 : i64, tpu.core_type = #tpu.core_type<tc>, window_params = [{transform_indices = @transform_0, window_bounds = array<i64: 512, 32>}, {pipeline_mode = #tpu.pipeline_mode<synchronous>, transform_indices = @transform_1, window_bounds = array<i64: 32, 16>}, {pipeline_mode = #tpu.pipeline_mode<synchronous>, transform_indices = @transform_2, window_bounds = array<i64: 1, 16>}, {pipeline_mode = #tpu.pipeline_mode<synchronous>, transform_indices = @transform_3, window_bounds = array<i64: 16, 16>}, {pipeline_mode = #tpu.pipeline_mode<synchronous>, transform_indices = @transform_4, window_bounds = array<i64: 1, 16>}, {pipeline_mode = #tpu.pipeline_mode<synchronous>, transform_indices = @transform_5, window_bounds = array<i64: 16, 16>}, {pipeline_mode = #tpu.pipeline_mode<synchronous>, transform_indices = @transform_6, window_bounds = array<i64: 1, 16>}, {pipeline_mode = #tpu.pipeline_mode<synchronous>, transform_indices = @transform_7, window_bounds = array<i64: 16, 4>}, {pipeline_mode = #tpu.pipeline_mode<synchronous>, transform_indices = @transform_8, window_bounds = array<i64: 1, 4>}, {transform_indices = @transform_9, window_bounds = array<i64: 512, 4>}]} {
    %c0 = arith.constant 0 : index
    %c0_0 = arith.constant 0 : index
    %0 = vector.load %arg1[%c0, %c0_0] : memref<512x32xf32, #tpu.memory_space<vmem>>, vector<512x32xf32>
    %c0_1 = arith.constant 0 : index
    %c0_2 = arith.constant 0 : index
    %1 = vector.load %arg2[%c0_1, %c0_2] : memref<32x16xf32, #tpu.memory_space<vmem>>, vector<32x16xf32>
    %cst = arith.constant dense<0.000000e+00> : vector<512x16xf32>
    %2 = tpu.matmul %0, %1, %cst {dimension_numbers = #tpu.dot_dimension_numbers<[1], [0], [0], [1], [0, 0, 1, 1], [], []>} : vector<512x32xf32>, vector<32x16xf32>, vector<512x16xf32> -> vector<512x16xf32>
    %c0_3 = arith.constant 0 : index
    %c0_4 = arith.constant 0 : index
    %3 = vector.load %arg3[%c0_3, %c0_4] : memref<1x16xf32, #tpu.memory_space<vmem>>, vector<1x16xf32>
    %4 = vector.broadcast %3 : vector<1x16xf32> to vector<512x16xf32>
    %5 = arith.addf %2, %4 : vector<512x16xf32>
    %cst_5 = arith.constant 0.000000e+00 : f32
    %6 = vector.broadcast %cst_5 : f32 to vector<512x16xf32>
    %7 = arith.maximumf %5, %6 : vector<512x16xf32>
    %c0_6 = arith.constant 0 : index
    %c0_7 = arith.constant 0 : index
    %8 = vector.load %arg4[%c0_6, %c0_7] : memref<16x16xf32, #tpu.memory_space<vmem>>, vector<16x16xf32>
    %cst_8 = arith.constant dense<0.000000e+00> : vector<512x16xf32>
    %9 = tpu.matmul %7, %8, %cst_8 {dimension_numbers = #tpu.dot_dimension_numbers<[1], [0], [0], [1], [0, 0, 1, 1], [], []>} : vector<512x16xf32>, vector<16x16xf32>, vector<512x16xf32> -> vector<512x16xf32>
    %c0_9 = arith.constant 0 : index
    %c0_10 = arith.constant 0 : index
    %10 = vector.load %arg5[%c0_9, %c0_10] : memref<1x16xf32, #tpu.memory_space<vmem>>, vector<1x16xf32>
    %11 = vector.broadcast %10 : vector<1x16xf32> to vector<512x16xf32>
    %12 = arith.addf %9, %11 : vector<512x16xf32>
    %cst_11 = arith.constant 0.000000e+00 : f32
    %13 = vector.broadcast %cst_11 : f32 to vector<512x16xf32>
    %14 = arith.maximumf %12, %13 : vector<512x16xf32>
    %c0_12 = arith.constant 0 : index
    %c0_13 = arith.constant 0 : index
    %15 = vector.load %arg6[%c0_12, %c0_13] : memref<16x16xf32, #tpu.memory_space<vmem>>, vector<16x16xf32>
    %cst_14 = arith.constant dense<0.000000e+00> : vector<512x16xf32>
    %16 = tpu.matmul %14, %15, %cst_14 {dimension_numbers = #tpu.dot_dimension_numbers<[1], [0], [0], [1], [0, 0, 1, 1], [], []>} : vector<512x16xf32>, vector<16x16xf32>, vector<512x16xf32> -> vector<512x16xf32>
    %c0_15 = arith.constant 0 : index
    %c0_16 = arith.constant 0 : index
    %17 = vector.load %arg7[%c0_15, %c0_16] : memref<1x16xf32, #tpu.memory_space<vmem>>, vector<1x16xf32>
    %18 = vector.broadcast %17 : vector<1x16xf32> to vector<512x16xf32>
    %19 = arith.addf %16, %18 : vector<512x16xf32>
    %cst_17 = arith.constant 0.000000e+00 : f32
    %20 = vector.broadcast %cst_17 : f32 to vector<512x16xf32>
    %21 = arith.maximumf %19, %20 : vector<512x16xf32>
    %c0_18 = arith.constant 0 : index
    %c0_19 = arith.constant 0 : index
    %22 = vector.load %arg8[%c0_18, %c0_19] : memref<16x4xf32, #tpu.memory_space<vmem>>, vector<16x4xf32>
    %cst_20 = arith.constant dense<0.000000e+00> : vector<512x4xf32>
    %23 = tpu.matmul %21, %22, %cst_20 {dimension_numbers = #tpu.dot_dimension_numbers<[1], [0], [0], [1], [0, 0, 1, 1], [], []>} : vector<512x16xf32>, vector<16x4xf32>, vector<512x4xf32> -> vector<512x4xf32>
    %c0_21 = arith.constant 0 : index
    %c0_22 = arith.constant 0 : index
    %24 = vector.load %arg9[%c0_21, %c0_22] : memref<1x4xf32, #tpu.memory_space<vmem>>, vector<1x4xf32>
    %25 = vector.broadcast %24 : vector<1x4xf32> to vector<512x4xf32>
    %26 = arith.addf %23, %25 : vector<512x4xf32>
    %c0_23 = arith.constant 0 : index
    %c0_24 = arith.constant 0 : index
    %27 = vector.load %arg10[%c0_23, %c0_24] : memref<512x4xf32, #tpu.memory_space<vmem>>, vector<512x4xf32>
    tpu.vector_store %arg10[%c0_23, %c0_24], %26 {strides = array<i32>} : memref<512x4xf32, #tpu.memory_space<vmem>>, vector<512x4xf32>,
    return
  }
  func.func @transform_0(%arg0: i32) -> (i32, i32) {
    %c0_i32 = arith.constant 0 : i32
    %c0_i32_0 = arith.constant 0 : i32
    return %arg0, %c0_i32 : i32, i32
  }
  func.func @transform_1(%arg0: i32) -> (i32, i32) {
    %c0_i32 = arith.constant 0 : i32
    %c0_i32_0 = arith.constant 0 : i32
    %c0_i32_1 = arith.constant 0 : i32
    return %c0_i32, %c0_i32_0 : i32, i32
  }
  func.func @transform_2(%arg0: i32) -> (i32, i32) {
    %c0_i32 = arith.constant 0 : i32
    %c0_i32_0 = arith.constant 0 : i32
    %c0_i32_1 = arith.constant 0 : i32
    return %c0_i32, %c0_i32_0 : i32, i32
  }
  func.func @transform_3(%arg0: i32) -> (i32, i32) {
    %c0_i32 = arith.constant 0 : i32
    %c0_i32_0 = arith.constant 0 : i32
    %c0_i32_1 = arith.constant 0 : i32
    return %c0_i32, %c0_i32_0 : i32, i32
  }
  func.func @transform_4(%arg0: i32) -> (i32, i32) {
    %c0_i32 = arith.constant 0 : i32
    %c0_i32_0 = arith.constant 0 : i32
    %c0_i32_1 = arith.constant 0 : i32
    return %c0_i32, %c0_i32_0 : i32, i32
  }
  func.func @transform_5(%arg0: i32) -> (i32, i32) {
    %c0_i32 = arith.constant 0 : i32
    %c0_i32_0 = arith.constant 0 : i32
    %c0_i32_1 = arith.constant 0 : i32
    return %c0_i32, %c0_i32_0 : i32, i32
  }
  func.func @transform_6(%arg0: i32) -> (i32, i32) {
    %c0_i32 = arith.constant 0 : i32
    %c0_i32_0 = arith.constant 0 : i32
    %c0_i32_1 = arith.constant 0 : i32
    return %c0_i32, %c0_i32_0 : i32, i32
  }
  func.func @transform_7(%arg0: i32) -> (i32, i32) {
    %c0_i32 = arith.constant 0 : i32
    %c0_i32_0 = arith.constant 0 : i32
    %c0_i32_1 = arith.constant 0 : i32
    return %c0_i32, %c0_i32_0 : i32, i32
  }
  func.func @transform_8(%arg0: i32) -> (i32, i32) {
    %c0_i32 = arith.constant 0 : i32
    %c0_i32_0 = arith.constant 0 : i32
    %c0_i32_1 = arith.constant 0 : i32
    return %c0_i32, %c0_i32_0 : i32, i32
  }
  func.func @transform_9(%arg0: i32) -> (i32, i32) {
    %c0_i32 = arith.constant 0 : i32
    %c0_i32_0 = arith.constant 0 : i32
    return %arg0, %c0_i32 : i32, i32
  }
}

</mosaic_0001>

<llo_original>
// kernel: tpu_custom_call.1
$region0: #{tpu_custom_call.1}
  #allocation0 [shape = 'u32[]', space=smem, size = 0x4, offset = 0x4, fixed_abs, tag = 'smem constant byte address 0x4 - core index']
  #allocation1 [shape = 'u32[72,128]{1,0:T(1,128)}', space=vmem, size = 0x9000, scoped, tag = 'internal scratch']
  %s0 = inlined_call_operand.vmem [shape: f32[512,32], index: 0, kind: input, shape index: {}]
  %s1 = inlined_call_operand.vmem [shape: f32[32,16], index: 1, kind: input, shape index: {}]
  %s2 = inlined_call_operand.vmem [shape: f32[1,16], index: 2, kind: input, shape index: {}]
  %s3 = inlined_call_operand.vmem [shape: f32[16,16], index: 3, kind: input, shape index: {}]
  %s4 = inlined_call_operand.vmem [shape: f32[1,16], index: 4, kind: input, shape index: {}]
  %s5 = inlined_call_operand.vmem [shape: f32[16,16], index: 5, kind: input, shape index: {}]
  %s6 = inlined_call_operand.vmem [shape: f32[1,16], index: 6, kind: input, shape index: {}]
  %s7 = inlined_call_operand.vmem [shape: f32[16,4], index: 7, kind: input, shape index: {}]
  %s8 = inlined_call_operand.vmem [shape: f32[1,4], index: 8, kind: input, shape index: {}]
  %s9 = inlined_call_operand.vmem [shape: f32[512,4], index: 9, kind: output, shape index: {}]
  %s10 = sld [smem:[#allocation0]]
  $region46: #{tpu_custom_call.1} parent=0
    _
  %s12 = ssub.s32 1, %s10
  %s13 = scalar_select 0, %s12, %s10
  // Predicated region
  $region2: #{tpu_custom_call.1} parent=0 // pred_check
    _
  $region3: #{tpu_custom_call.1} parent=0 // pred_check_branch
    %15 = sbr.rel (0) target = $region5
  $region4: #{tpu_custom_call.1} parent=0 // pred_region
    _
  $region5: #{tpu_custom_call.1} parent=0 // pred_fallthru
    _
  // Predicated region
  $region6: #{tpu_custom_call.1} parent=0 // pred_check
    _
  $region7: #{tpu_custom_call.1} parent=0 // pred_check_branch
    %17 = sbr.rel (0) target = $region9
  $region8: #{tpu_custom_call.1} parent=0 // pred_region
    _
  $region9: #{tpu_custom_call.1} parent=0 // pred_fallthru
    _
  // Predicated region
  $region10: #{tpu_custom_call.1} parent=0 // pred_check
    _
  $region11: #{tpu_custom_call.1} parent=0 // pred_check_branch
    %19 = sbr.rel (0) target = $region13
  $region12: #{tpu_custom_call.1} parent=0 // pred_region
    _
  $region13: #{tpu_custom_call.1} parent=0 // pred_fallthru
    _
  // Predicated region
  $region14: #{tpu_custom_call.1} parent=0 // pred_check
    _
  $region15: #{tpu_custom_call.1} parent=0 // pred_check_branch
    %21 = sbr.rel (0) target = $region17
  $region16: #{tpu_custom_call.1} parent=0 // pred_region
    _
  $region17: #{tpu_custom_call.1} parent=0 // pred_fallthru
    _
  // Predicated region
  $region18: #{tpu_custom_call.1} parent=0 // pred_check
    _
  $region19: #{tpu_custom_call.1} parent=0 // pred_check_branch
    %23 = sbr.rel (0) target = $region21
  $region20: #{tpu_custom_call.1} parent=0 // pred_region
    _
  $region21: #{tpu_custom_call.1} parent=0 // pred_fallthru
    _
  // Predicated region
  $region22: #{tpu_custom_call.1} parent=0 // pred_check
    _
  $region23: #{tpu_custom_call.1} parent=0 // pred_check_branch
    %25 = sbr.rel (0) target = $region25
  $region24: #{tpu_custom_call.1} parent=0 // pred_region
    _
  $region25: #{tpu_custom_call.1} parent=0 // pred_fallthru
    _
  // Predicated region
  $region26: #{tpu_custom_call.1} parent=0 // pred_check
    _
  $region27: #{tpu_custom_call.1} parent=0 // pred_check_branch
    %27 = sbr.rel (0) target = $region29
  $region28: #{tpu_custom_call.1} parent=0 // pred_region
    _
  $region29: #{tpu_custom_call.1} parent=0 // pred_fallthru
    _
  // Predicated region
  $region30: #{tpu_custom_call.1} parent=0 // pred_check
    _
  $region31: #{tpu_custom_call.1} parent=0 // pred_check_branch
    %29 = sbr.rel (0) target = $region33
  $region32: #{tpu_custom_call.1} parent=0 // pred_region
    _
  $region33: #{tpu_custom_call.1} parent=0 // pred_fallthru
    _
  // Predicated region
  $region34: #{tpu_custom_call.1} parent=0 // pred_check
    _
  $region35: #{tpu_custom_call.1} parent=0 // pred_check_branch
    %31 = sbr.rel (0) target = $region37
  $region36: #{tpu_custom_call.1} parent=0 // pred_region
    _
  $region37: #{tpu_custom_call.1} parent=0 // pred_fallthru
    _
  %v32 = vld [vmem:[%s0] sm:$0xff]
  %v33 = vld [vmem:[%s0 + $0x8] sm:$0xff]
  %v34 = vld [vmem:[%s0 + $0x10] sm:$0xff]
  %v35 = vld [vmem:[%s0 + $0x18] sm:$0xff]
  %v36 = vld [vmem:[%s0 + $0x20] sm:$0xff]
  %v37 = vld [vmem:[%s0 + $0x28] sm:$0xff]
  %v38 = vld [vmem:[%s0 + $0x30] sm:$0xff]
  %v39 = vld [vmem:[%s0 + $0x38] sm:$0xff]
  %v40 = vld [vmem:[%s0 + $0x40] sm:$0xff]
  %v41 = vld [vmem:[%s0 + $0x48] sm:$0xff]
  %v42 = vld [vmem:[%s0 + $0x50] sm:$0xff]
  %v43 = vld [vmem:[%s0 + $0x58] sm:$0xff]
  %v44 = vld [vmem:[%s0 + $0x60] sm:$0xff]
  %v45 = vld [vmem:[%s0 + $0x68] sm:$0xff]
  %v46 = vld [vmem:[%s0 + $0x70] sm:$0xff]
  %v47 = vld [vmem:[%s0 + $0x78] sm:$0xff]
  %v48 = vld [vmem:[%s0 + $0x80] sm:$0xff]
  %v49 = vld [vmem:[%s0 + $0x88] sm:$0xff]
  %v50 = vld [vmem:[%s0 + $0x90] sm:$0xff]
  %v51 = vld [vmem:[%s0 + $0x98] sm:$0xff]
  %v52 = vld [vmem:[%s0 + $0xa0] sm:$0xff]
  %v53 = vld [vmem:[%s0 + $0xa8] sm:$0xff]
  %v54 = vld [vmem:[%s0 + $0xb0] sm:$0xff]
  %v55 = vld [vmem:[%s0 + $0xb8] sm:$0xff]
  %v56 = vld [vmem:[%s0 + $0xc0] sm:$0xff]
  %v57 = vld [vmem:[%s0 + $0xc8] sm:$0xff]
  %v58 = vld [vmem:[%s0 + $0xd0] sm:$0xff]
  %v59 = vld [vmem:[%s0 + $0xd8] sm:$0xff]
  %v60 = vld [vmem:[%s0 + $0xe0] sm:$0xff]
  %v61 = vld [vmem:[%s0 + $0xe8] sm:$0xff]
  %v62 = vld [vmem:[%s0 + $0xf0] sm:$0xff]
  %v63 = vld [vmem:[%s0 + $0xf8] sm:$0xff]
  %v64 = vld [vmem:[%s0 + $0x100] sm:$0xff]
  %v65 = vld [vmem:[%s0 + $0x108] sm:$0xff]
  %v66 = vld [vmem:[%s0 + $0x110] sm:$0xff]
  %v67 = vld [vmem:[%s0 + $0x118] sm:$0xff]
  %v68 = vld [vmem:[%s0 + $0x120] sm:$0xff]
  %v69 = vld [vmem:[%s0 + $0x128] sm:$0xff]
  %v70 = vld [vmem:[%s0 + $0x130] sm:$0xff]
  %v71 = vld [vmem:[%s0 + $0x138] sm:$0xff]
  %v72 = vld [vmem:[%s0 + $0x140] sm:$0xff]
  %v73 = vld [vmem:[%s0 + $0x148] sm:$0xff]
  %v74 = vld [vmem:[%s0 + $0x150] sm:$0xff]
  %v75 = vld [vmem:[%s0 + $0x158] sm:$0xff]
  %v76 = vld [vmem:[%s0 + $0x160] sm:$0xff]
  %v77 = vld [vmem:[%s0 + $0x168] sm:$0xff]
  %v78 = vld [vmem:[%s0 + $0x170] sm:$0xff]
  %v79 = vld [vmem:[%s0 + $0x178] sm:$0xff]
  %v80 = vld [vmem:[%s0 + $0x180] sm:$0xff]
  %v81 = vld [vmem:[%s0 + $0x188] sm:$0xff]
  %v82 = vld [vmem:[%s0 + $0x190] sm:$0xff]
  %v83 = vld [vmem:[%s0 + $0x198] sm:$0xff]
  %v84 = vld [vmem:[%s0 + $0x1a0] sm:$0xff]
  %v85 = vld [vmem:[%s0 + $0x1a8] sm:$0xff]
  %v86 = vld [vmem:[%s0 + $0x1b0] sm:$0xff]
  %v87 = vld [vmem:[%s0 + $0x1b8] sm:$0xff]
  %v88 = vld [vmem:[%s0 + $0x1c0] sm:$0xff]
  %v89 = vld [vmem:[%s0 + $0x1c8] sm:$0xff]
  %v90 = vld [vmem:[%s0 + $0x1d0] sm:$0xff]
  %v91 = vld [vmem:[%s0 + $0x1d8] sm:$0xff]
  %v92 = vld [vmem:[%s0 + $0x1e0] sm:$0xff]
  %v93 = vld [vmem:[%s0 + $0x1e8] sm:$0xff]
  %v94 = vld [vmem:[%s0 + $0x1f0] sm:$0xff]
  %v95 = vld [vmem:[%s0 + $0x1f8] sm:$0xff]
  %v96 = vld [vmem:[%s1] sm:$0xff]
  %v97 = vld [vmem:[%s1 + $0x8] sm:$0xff]
  %v98 = vld [vmem:[%s1 + $0x10] sm:$0xff]
  %v99 = vld [vmem:[%s1 + $0x18] sm:$0xff]
  %v100 = vld [vmem:[%s2] sm:$0x1]
  %v102 = vperm.slane %v100, 0
  %vm104 = vcmask 261120
  %v106 = vsel %vm104, %v32, 0
  %v109 = vsel %vm104, %v33, 0
  %v112 = vsel %vm104, %v34, 0
  %v115 = vsel %vm104, %v35, 0
  %v118 = vsel %vm104, %v36, 0
  %v121 = vsel %vm104, %v37, 0
  %v124 = vsel %vm104, %v38, 0
  %v127 = vsel %vm104, %v39, 0
  %v130 = vsel %vm104, %v40, 0
  %v133 = vsel %vm104, %v41, 0
  %v136 = vsel %vm104, %v42, 0
  %v139 = vsel %vm104, %v43, 0
  %v142 = vsel %vm104, %v44, 0
  %v145 = vsel %vm104, %v45, 0
  %v148 = vsel %vm104, %v46, 0
  %v151 = vsel %vm104, %v47, 0
  %v154 = vsel %vm104, %v48, 0
  %v157 = vsel %vm104, %v49, 0
  %v160 = vsel %vm104, %v50, 0
  %v163 = vsel %vm104, %v51, 0
  %v166 = vsel %vm104, %v52, 0
  %v169 = vsel %vm104, %v53, 0
  %v172 = vsel %vm104, %v54, 0
  %v175 = vsel %vm104, %v55, 0
  %v178 = vsel %vm104, %v56, 0
  %v181 = vsel %vm104, %v57, 0
  %v184 = vsel %vm104, %v58, 0
  %v187 = vsel %vm104, %v59, 0
  %v190 = vsel %vm104, %v60, 0
  %v193 = vsel %vm104, %v61, 0
  %v196 = vsel %vm104, %v62, 0
  %v199 = vsel %vm104, %v63, 0
  %v202 = vsel %vm104, %v64, 0
  %v205 = vsel %vm104, %v65, 0
  %v208 = vsel %vm104, %v66, 0
  %v211 = vsel %vm104, %v67, 0
  %v214 = vsel %vm104, %v68, 0
  %v217 = vsel %vm104, %v69, 0
  %v220 = vsel %vm104, %v70, 0
  %v223 = vsel %vm104, %v71, 0
  %v226 = vsel %vm104, %v72, 0
  %v229 = vsel %vm104, %v73, 0
  %v232 = vsel %vm104, %v74, 0
  %v235 = vsel %vm104, %v75, 0
  %v238 = vsel %vm104, %v76, 0
  %v241 = vsel %vm104, %v77, 0
  %v244 = vsel %vm104, %v78, 0
  %v247 = vsel %vm104, %v79, 0
  %v250 = vsel %vm104, %v80, 0
  %v253 = vsel %vm104, %v81, 0
  %v256 = vsel %vm104, %v82, 0
  %v259 = vsel %vm104, %v83, 0
  %v262 = vsel %vm104, %v84, 0
  %v265 = vsel %vm104, %v85, 0
  %v268 = vsel %vm104, %v86, 0
  %v271 = vsel %vm104, %v87, 0
  %v274 = vsel %vm104, %v88, 0
  %v277 = vsel %vm104, %v89, 0
  %v280 = vsel %vm104, %v90, 0
  %v283 = vsel %vm104, %v91, 0
  %v286 = vsel %vm104, %v92, 0
  %v289 = vsel %vm104, %v93, 0
  %v292 = vsel %vm104, %v94, 0
  %v295 = vsel %vm104, %v95, 0
  %297 = vmatpush.msra.mxu0 0.0
  %298 = vmatpush.msra.mxu0 0.0
  %299 = vmatpush.msra.mxu0 0.0
  %300 = vmatpush.msra.mxu0 0.0
  %301 = vmatpush.msra.mxu0 0.0
  %302 = vmatpush.msra.mxu0 0.0
  %303 = vmatpush.msra.mxu0 0.0
  %304 = vmatpush.msra.mxu0 0.0
  %305 = vmatpush.msra.mxu0 0.0
  %306 = vmatpush.msra.mxu0 0.0
  %307 = vmatpush.msra.mxu0 0.0
  %308 = vmatpush.msra.mxu0 0.0
  %309 = vmatpush.msra.mxu0 %v99
  %310 = vmatpush.msra.mxu0 %v98
  %311 = vmatpush.msra.mxu0 %v97
  %312 = vmatpush.msra.mxu0 %v96
  %313 = vmatmul.f32.gmra.mxu0 %v106
  %v314 = vpop.f32.mrf.mxu0
  %v315 = vadd.f32 %v102, %v314
  %316 = vmatmul.f32.gmra.mxu0 %v109
  %v317 = vpop.f32.mrf.mxu0
  %v318 = vadd.f32 %v102, %v317
  %319 = vmatmul.f32.gmra.mxu0 %v112
  %v320 = vpop.f32.mrf.mxu0
  %v321 = vadd.f32 %v102, %v320
  %322 = vmatmul.f32.gmra.mxu0 %v115
  %v323 = vpop.f32.mrf.mxu0
  %v324 = vadd.f32 %v102, %v323
  %325 = vmatmul.f32.gmra.mxu0 %v118
  %v326 = vpop.f32.mrf.mxu0
  %v327 = vadd.f32 %v102, %v326
  %328 = vmatmul.f32.gmra.mxu0 %v121
  %v329 = vpop.f32.mrf.mxu0
  %v330 = vadd.f32 %v102, %v329
  %331 = vmatmul.f32.gmra.mxu0 %v124
  %v332 = vpop.f32.mrf.mxu0
  %v333 = vadd.f32 %v102, %v332
  %334 = vmatmul.f32.gmra.mxu0 %v127
  %v335 = vpop.f32.mrf.mxu0
  %v336 = vadd.f32 %v102, %v335
  %337 = vmatmul.f32.gmra.mxu0 %v130
  %v338 = vpop.f32.mrf.mxu0
  %v339 = vadd.f32 %v102, %v338
  %340 = vmatmul.f32.gmra.mxu0 %v133
  %v341 = vpop.f32.mrf.mxu0
  %v342 = vadd.f32 %v102, %v341
  %343 = vmatmul.f32.gmra.mxu0 %v136
  %v344 = vpop.f32.mrf.mxu0
  %v345 = vadd.f32 %v102, %v344
  %346 = vmatmul.f32.gmra.mxu0 %v139
  %v347 = vpop.f32.mrf.mxu0
  %v348 = vadd.f32 %v102, %v347
  %349 = vmatmul.f32.gmra.mxu0 %v142
  %v350 = vpop.f32.mrf.mxu0
  %v351 = vadd.f32 %v102, %v350
  %352 = vmatmul.f32.gmra.mxu0 %v145
  %v353 = vpop.f32.mrf.mxu0
  %v354 = vadd.f32 %v102, %v353
  %355 = vmatmul.f32.gmra.mxu0 %v148
  %v356 = vpop.f32.mrf.mxu0
  %v357 = vadd.f32 %v102, %v356
  %358 = vmatmul.f32.gmra.mxu0 %v151
  %v359 = vpop.f32.mrf.mxu0
  %v360 = vadd.f32 %v102, %v359
  %361 = vmatmul.f32.gmra.mxu0 %v154
  %v362 = vpop.f32.mrf.mxu0
  %v363 = vadd.f32 %v102, %v362
  %364 = vmatmul.f32.gmra.mxu0 %v157
  %v365 = vpop.f32.mrf.mxu0
  %v366 = vadd.f32 %v102, %v365
  %367 = vmatmul.f32.gmra.mxu0 %v160
  %v368 = vpop.f32.mrf.mxu0
  %v369 = vadd.f32 %v102, %v368
  %370 = vmatmul.f32.gmra.mxu0 %v163
  %v371 = vpop.f32.mrf.mxu0
  %v372 = vadd.f32 %v102, %v371
  %373 = vmatmul.f32.gmra.mxu0 %v166
  %v374 = vpop.f32.mrf.mxu0
  %v375 = vadd.f32 %v102, %v374
  %376 = vmatmul.f32.gmra.mxu0 %v169
  %v377 = vpop.f32.mrf.mxu0
  %v378 = vadd.f32 %v102, %v377
  %379 = vmatmul.f32.gmra.mxu0 %v172
  %v380 = vpop.f32.mrf.mxu0
  %v381 = vadd.f32 %v102, %v380
  %382 = vmatmul.f32.gmra.mxu0 %v175
  %v383 = vpop.f32.mrf.mxu0
  %v384 = vadd.f32 %v102, %v383
  %385 = vmatmul.f32.gmra.mxu0 %v178
  %v386 = vpop.f32.mrf.mxu0
  %v387 = vadd.f32 %v102, %v386
  %388 = vmatmul.f32.gmra.mxu0 %v181
  %v389 = vpop.f32.mrf.mxu0
  %v390 = vadd.f32 %v102, %v389
  %391 = vmatmul.f32.gmra.mxu0 %v184
  %v392 = vpop.f32.mrf.mxu0
  %v393 = vadd.f32 %v102, %v392
  %394 = vmatmul.f32.gmra.mxu0 %v187
  %v395 = vpop.f32.mrf.mxu0
  %v396 = vadd.f32 %v102, %v395
  %397 = vmatmul.f32.gmra.mxu0 %v190
  %v398 = vpop.f32.mrf.mxu0
  %v399 = vadd.f32 %v102, %v398
  %400 = vmatmul.f32.gmra.mxu0 %v193
  %v401 = vpop.f32.mrf.mxu0
  %v402 = vadd.f32 %v102, %v401
  %403 = vmatmul.f32.gmra.mxu0 %v196
  %v404 = vpop.f32.mrf.mxu0
  %v405 = vadd.f32 %v102, %v404
  %406 = vmatmul.f32.gmra.mxu0 %v199
  %v407 = vpop.f32.mrf.mxu0
  %v408 = vadd.f32 %v102, %v407
  %409 = vmatmul.f32.gmra.mxu0 %v202
  %v410 = vpop.f32.mrf.mxu0
  %v411 = vadd.f32 %v102, %v410
  %412 = vmatmul.f32.gmra.mxu0 %v205
  %v413 = vpop.f32.mrf.mxu0
  %v414 = vadd.f32 %v102, %v413
  %415 = vmatmul.f32.gmra.mxu0 %v208
  %v416 = vpop.f32.mrf.mxu0
  %v417 = vadd.f32 %v102, %v416
  %418 = vmatmul.f32.gmra.mxu0 %v211
  %v419 = vpop.f32.mrf.mxu0
  %v420 = vadd.f32 %v102, %v419
  %421 = vmatmul.f32.gmra.mxu0 %v214
  %v422 = vpop.f32.mrf.mxu0
  %v423 = vadd.f32 %v102, %v422
  %424 = vmatmul.f32.gmra.mxu0 %v217
  %v425 = vpop.f32.mrf.mxu0
  %v426 = vadd.f32 %v102, %v425
  %427 = vmatmul.f32.gmra.mxu0 %v220
  %v428 = vpop.f32.mrf.mxu0
  %v429 = vadd.f32 %v102, %v428
  %430 = vmatmul.f32.gmra.mxu0 %v223
  %v431 = vpop.f32.mrf.mxu0
  %v432 = vadd.f32 %v102, %v431
  %433 = vmatmul.f32.gmra.mxu0 %v226
  %v434 = vpop.f32.mrf.mxu0
  %v435 = vadd.f32 %v102, %v434
  %436 = vmatmul.f32.gmra.mxu0 %v229
  %v437 = vpop.f32.mrf.mxu0
  %v438 = vadd.f32 %v102, %v437
  %439 = vmatmul.f32.gmra.mxu0 %v232
  %v440 = vpop.f32.mrf.mxu0
  %v441 = vadd.f32 %v102, %v440
  %442 = vmatmul.f32.gmra.mxu0 %v235
  %v443 = vpop.f32.mrf.mxu0
  %v444 = vadd.f32 %v102, %v443
  %445 = vmatmul.f32.gmra.mxu0 %v238
  %v446 = vpop.f32.mrf.mxu0
  %v447 = vadd.f32 %v102, %v446
  %448 = vmatmul.f32.gmra.mxu0 %v241
  %v449 = vpop.f32.mrf.mxu0
  %v450 = vadd.f32 %v102, %v449
  %451 = vmatmul.f32.gmra.mxu0 %v244
  %v452 = vpop.f32.mrf.mxu0
  %v453 = vadd.f32 %v102, %v452
  %454 = vmatmul.f32.gmra.mxu0 %v247
  %v455 = vpop.f32.mrf.mxu0
  %v456 = vadd.f32 %v102, %v455
  %457 = vmatmul.f32.gmra.mxu0 %v250
  %v458 = vpop.f32.mrf.mxu0
  %v459 = vadd.f32 %v102, %v458
  %460 = vmatmul.f32.gmra.mxu0 %v253
  %v461 = vpop.f32.mrf.mxu0
  %v462 = vadd.f32 %v102, %v461
  %463 = vmatmul.f32.gmra.mxu0 %v256
  %v464 = vpop.f32.mrf.mxu0
  %v465 = vadd.f32 %v102, %v464
  %466 = vmatmul.f32.gmra.mxu0 %v259
  %v467 = vpop.f32.mrf.mxu0
  %v468 = vadd.f32 %v102, %v467
  %469 = vmatmul.f32.gmra.mxu0 %v262
  %v470 = vpop.f32.mrf.mxu0
  %v471 = vadd.f32 %v102, %v470
  %472 = vmatmul.f32.gmra.mxu0 %v265
  %v473 = vpop.f32.mrf.mxu0
  %v474 = vadd.f32 %v102, %v473
  %475 = vmatmul.f32.gmra.mxu0 %v268
  %v476 = vpop.f32.mrf.mxu0
  %v477 = vadd.f32 %v102, %v476
  %478 = vmatmul.f32.gmra.mxu0 %v271
  %v479 = vpop.f32.mrf.mxu0
  %v480 = vadd.f32 %v102, %v479
  %481 = vmatmul.f32.gmra.mxu0 %v274
  %v482 = vpop.f32.mrf.mxu0
  %v483 = vadd.f32 %v102, %v482
  %484 = vmatmul.f32.gmra.mxu0 %v277
  %v485 = vpop.f32.mrf.mxu0
  %v486 = vadd.f32 %v102, %v485
  %487 = vmatmul.f32.gmra.mxu0 %v280
  %v488 = vpop.f32.mrf.mxu0
  %v489 = vadd.f32 %v102, %v488
  %490 = vmatmul.f32.gmra.mxu0 %v283
  %v491 = vpop.f32.mrf.mxu0
  %v492 = vadd.f32 %v102, %v491
  %493 = vmatmul.f32.gmra.mxu0 %v286
  %v494 = vpop.f32.mrf.mxu0
  %v495 = vadd.f32 %v102, %v494
  %496 = vmatmul.f32.gmra.mxu0 %v289
  %v497 = vpop.f32.mrf.mxu0
  %v498 = vadd.f32 %v102, %v497
  %499 = vmatmul.f32.gmra.mxu0 %v292
  %v500 = vpop.f32.mrf.mxu0
  %v501 = vadd.f32 %v102, %v500
  %502 = vmatmul.f32.gmra.mxu0 %v295
  %v503 = vpop.f32.mrf.mxu0
  %v504 = vadd.f32 %v102, %v503
  %505 = vdwg.mxu0
  %v506 = vmax.f32 %v315, 0.0
  %v507 = vmax.f32 %v318, 0.0
  %v508 = vmax.f32 %v321, 0.0
  %v509 = vmax.f32 %v324, 0.0
  %v510 = vmax.f32 %v327, 0.0
  %v511 = vmax.f32 %v330, 0.0
  %v512 = vmax.f32 %v333, 0.0
  %v513 = vmax.f32 %v336, 0.0
  %v514 = vmax.f32 %v339, 0.0
  %v515 = vmax.f32 %v342, 0.0
  %v516 = vmax.f32 %v345, 0.0
  %v517 = vmax.f32 %v348, 0.0
  %v518 = vmax.f32 %v351, 0.0
  %v519 = vmax.f32 %v354, 0.0
  %v520 = vmax.f32 %v357, 0.0
  %v521 = vmax.f32 %v360, 0.0
  %v522 = vmax.f32 %v363, 0.0
  %v523 = vmax.f32 %v366, 0.0
  %v524 = vmax.f32 %v369, 0.0
  %v525 = vmax.f32 %v372, 0.0
  %v526 = vmax.f32 %v375, 0.0
  %v527 = vmax.f32 %v378, 0.0
  %v528 = vmax.f32 %v381, 0.0
  %v529 = vmax.f32 %v384, 0.0
  %v530 = vmax.f32 %v387, 0.0
  %v531 = vmax.f32 %v390, 0.0
  %v532 = vmax.f32 %v393, 0.0
  %v533 = vmax.f32 %v396, 0.0
  %v534 = vmax.f32 %v399, 0.0
  %v535 = vmax.f32 %v402, 0.0
  %v536 = vmax.f32 %v405, 0.0
  %v537 = vmax.f32 %v408, 0.0
  %v538 = vmax.f32 %v411, 0.0
  %v539 = vmax.f32 %v414, 0.0
  %v540 = vmax.f32 %v417, 0.0
  %v541 = vmax.f32 %v420, 0.0
  %v542 = vmax.f32 %v423, 0.0
  %v543 = vmax.f32 %v426, 0.0
  %v544 = vmax.f32 %v429, 0.0
  %v545 = vmax.f32 %v432, 0.0
  %v546 = vmax.f32 %v435, 0.0
  %v547 = vmax.f32 %v438, 0.0
  %v548 = vmax.f32 %v441, 0.0
  %v549 = vmax.f32 %v444, 0.0
  %v550 = vmax.f32 %v447, 0.0
  %v551 = vmax.f32 %v450, 0.0
  %v552 = vmax.f32 %v453, 0.0
  %v553 = vmax.f32 %v456, 0.0
  %v554 = vmax.f32 %v459, 0.0
  %v555 = vmax.f32 %v462, 0.0
  %v556 = vmax.f32 %v465, 0.0
  %v557 = vmax.f32 %v468, 0.0
  %v558 = vmax.f32 %v471, 0.0
  %v559 = vmax.f32 %v474, 0.0
  %v560 = vmax.f32 %v477, 0.0
  %v561 = vmax.f32 %v480, 0.0
  %v562 = vmax.f32 %v483, 0.0
  %v563 = vmax.f32 %v486, 0.0
  %v564 = vmax.f32 %v489, 0.0
  %v565 = vmax.f32 %v492, 0.0
  %v566 = vmax.f32 %v495, 0.0
  %v567 = vmax.f32 %v498, 0.0
  %v568 = vmax.f32 %v501, 0.0
  %v569 = vmax.f32 %v504, 0.0
  %v570 = vld [vmem:[%s3] sm:$0xff]
  %v571 = vld [vmem:[%s3 + $0x8] sm:$0xff]
  %v572 = vld [vmem:[%s4] sm:$0x1]
  %v574 = vperm.slane %v572, 0
  %vm576 = vcmask 130048
  %v578 = vsel %vm576, %v506, 0
  %v581 = vsel %vm576, %v507, 0
  %v584 = vsel %vm576, %v508, 0
  %v587 = vsel %vm576, %v509, 0
  %v590 = vsel %vm576, %v510, 0
  %v593 = vsel %vm576, %v511, 0
  %v596 = vsel %vm576, %v512, 0
  %v599 = vsel %vm576, %v513, 0
  %v602 = vsel %vm576, %v514, 0
  %v605 = vsel %vm576, %v515, 0
  %v608 = vsel %vm576, %v516, 0
  %v611 = vsel %vm576, %v517, 0
  %v614 = vsel %vm576, %v518, 0
  %v617 = vsel %vm576, %v519, 0
  %v620 = vsel %vm576, %v520, 0
  %v623 = vsel %vm576, %v521, 0
  %v626 = vsel %vm576, %v522, 0
  %v629 = vsel %vm576, %v523, 0
  %v632 = vsel %vm576, %v524, 0
  %v635 = vsel %vm576, %v525, 0
  %v638 = vsel %vm576, %v526, 0
  %v641 = vsel %vm576, %v527, 0
  %v644 = vsel %vm576, %v528, 0
  %v647 = vsel %vm576, %v529, 0
  %v650 = vsel %vm576, %v530, 0
  %v653 = vsel %vm576, %v531, 0
  %v656 = vsel %vm576, %v532, 0
  %v659 = vsel %vm576, %v533, 0
  %v662 = vsel %vm576, %v534, 0
  %v665 = vsel %vm576, %v535, 0
  %v668 = vsel %vm576, %v536, 0
  %v671 = vsel %vm576, %v537, 0
  %v674 = vsel %vm576, %v538, 0
  %v677 = vsel %vm576, %v539, 0
  %v680 = vsel %vm576, %v540, 0
  %v683 = vsel %vm576, %v541, 0
  %v686 = vsel %vm576, %v542, 0
  %v689 = vsel %vm576, %v543, 0
  %v692 = vsel %vm576, %v544, 0
  %v695 = vsel %vm576, %v545, 0
  %v698 = vsel %vm576, %v546, 0
  %v701 = vsel %vm576, %v547, 0
  %v704 = vsel %vm576, %v548, 0
  %v707 = vsel %vm576, %v549, 0
  %v710 = vsel %vm576, %v550, 0
  %v713 = vsel %vm576, %v551, 0
  %v716 = vsel %vm576, %v552, 0
  %v719 = vsel %vm576, %v553, 0
  %v722 = vsel %vm576, %v554, 0
  %v725 = vsel %vm576, %v555, 0
  %v728 = vsel %vm576, %v556, 0
  %v731 = vsel %vm576, %v557, 0
  %v734 = vsel %vm576, %v558, 0
  %v737 = vsel %vm576, %v559, 0
  %v740 = vsel %vm576, %v560, 0
  %v743 = vsel %vm576, %v561, 0
  %v746 = vsel %vm576, %v562, 0
  %v749 = vsel %vm576, %v563, 0
  %v752 = vsel %vm576, %v564, 0
  %v755 = vsel %vm576, %v565, 0
  %v758 = vsel %vm576, %v566, 0
  %v761 = vsel %vm576, %v567, 0
  %v764 = vsel %vm576, %v568, 0
  %v767 = vsel %vm576, %v569, 0
  %769 = vmatpush.msra.mxu0 0.0
  %770 = vmatpush.msra.mxu0 0.0
  %771 = vmatpush.msra.mxu0 0.0
  %772 = vmatpush.msra.mxu0 0.0
  %773 = vmatpush.msra.mxu0 0.0
  %774 = vmatpush.msra.mxu0 0.0
  %775 = vmatpush.msra.mxu0 0.0
  %776 = vmatpush.msra.mxu0 0.0
  %777 = vmatpush.msra.mxu0 0.0
  %778 = vmatpush.msra.mxu0 0.0
  %779 = vmatpush.msra.mxu0 0.0
  %780 = vmatpush.msra.mxu0 0.0
  %781 = vmatpush.msra.mxu0 0.0
  %782 = vmatpush.msra.mxu0 0.0
  %783 = vmatpush.msra.mxu0 %v571
  %784 = vmatpush.msra.mxu0 %v570
  %785 = vmatmul.f32.gmra.mxu0 %v578
  %v786 = vpop.f32.mrf.mxu0
  %v787 = vadd.f32 %v574, %v786
  %788 = vmatmul.f32.gmra.mxu0 %v581
  %v789 = vpop.f32.mrf.mxu0
  %v790 = vadd.f32 %v574, %v789
  %791 = vmatmul.f32.gmra.mxu0 %v584
  %v792 = vpop.f32.mrf.mxu0
  %v793 = vadd.f32 %v574, %v792
  %794 = vmatmul.f32.gmra.mxu0 %v587
  %v795 = vpop.f32.mrf.mxu0
  %v796 = vadd.f32 %v574, %v795
  %797 = vmatmul.f32.gmra.mxu0 %v590
  %v798 = vpop.f32.mrf.mxu0
  %v799 = vadd.f32 %v574, %v798
  %800 = vmatmul.f32.gmra.mxu0 %v593
  %v801 = vpop.f32.mrf.mxu0
  %v802 = vadd.f32 %v574, %v801
  %803 = vmatmul.f32.gmra.mxu0 %v596
  %v804 = vpop.f32.mrf.mxu0
  %v805 = vadd.f32 %v574, %v804
  %806 = vmatmul.f32.gmra.mxu0 %v599
  %v807 = vpop.f32.mrf.mxu0
  %v808 = vadd.f32 %v574, %v807
  %809 = vmatmul.f32.gmra.mxu0 %v602
  %v810 = vpop.f32.mrf.mxu0
  %v811 = vadd.f32 %v574, %v810
  %812 = vmatmul.f32.gmra.mxu0 %v605
  %v813 = vpop.f32.mrf.mxu0
  %v814 = vadd.f32 %v574, %v813
  %815 = vmatmul.f32.gmra.mxu0 %v608
  %v816 = vpop.f32.mrf.mxu0
  %v817 = vadd.f32 %v574, %v816
  %818 = vmatmul.f32.gmra.mxu0 %v611
  %v819 = vpop.f32.mrf.mxu0
  %v820 = vadd.f32 %v574, %v819
  %821 = vmatmul.f32.gmra.mxu0 %v614
  %v822 = vpop.f32.mrf.mxu0
  %v823 = vadd.f32 %v574, %v822
  %824 = vmatmul.f32.gmra.mxu0 %v617
  %v825 = vpop.f32.mrf.mxu0
  %v826 = vadd.f32 %v574, %v825
  %827 = vmatmul.f32.gmra.mxu0 %v620
  %v828 = vpop.f32.mrf.mxu0
  %v829 = vadd.f32 %v574, %v828
  %830 = vmatmul.f32.gmra.mxu0 %v623
  %v831 = vpop.f32.mrf.mxu0
  %v832 = vadd.f32 %v574, %v831
  %833 = vmatmul.f32.gmra.mxu0 %v626
  %v834 = vpop.f32.mrf.mxu0
  %v835 = vadd.f32 %v574, %v834
  %836 = vmatmul.f32.gmra.mxu0 %v629
  %v837 = vpop.f32.mrf.mxu0
  %v838 = vadd.f32 %v574, %v837
  %839 = vmatmul.f32.gmra.mxu0 %v632
  %v840 = vpop.f32.mrf.mxu0
  %v841 = vadd.f32 %v574, %v840
  %842 = vmatmul.f32.gmra.mxu0 %v635
  %v843 = vpop.f32.mrf.mxu0
  %v844 = vadd.f32 %v574, %v843
  %845 = vmatmul.f32.gmra.mxu0 %v638
  %v846 = vpop.f32.mrf.mxu0
  %v847 = vadd.f32 %v574, %v846
  %848 = vmatmul.f32.gmra.mxu0 %v641
  %v849 = vpop.f32.mrf.mxu0
  %v850 = vadd.f32 %v574, %v849
  %851 = vmatmul.f32.gmra.mxu0 %v644
  %v852 = vpop.f32.mrf.mxu0
  %v853 = vadd.f32 %v574, %v852
  %854 = vmatmul.f32.gmra.mxu0 %v647
  %v855 = vpop.f32.mrf.mxu0
  %v856 = vadd.f32 %v574, %v855
  %857 = vmatmul.f32.gmra.mxu0 %v650
  %v858 = vpop.f32.mrf.mxu0
  %v859 = vadd.f32 %v574, %v858
  %860 = vmatmul.f32.gmra.mxu0 %v653
  %v861 = vpop.f32.mrf.mxu0
  %v862 = vadd.f32 %v574, %v861
  %863 = vmatmul.f32.gmra.mxu0 %v656
  %v864 = vpop.f32.mrf.mxu0
  %v865 = vadd.f32 %v574, %v864
  %866 = vmatmul.f32.gmra.mxu0 %v659
  %v867 = vpop.f32.mrf.mxu0
  %v868 = vadd.f32 %v574, %v867
  %869 = vmatmul.f32.gmra.mxu0 %v662
  %v870 = vpop.f32.mrf.mxu0
  %v871 = vadd.f32 %v574, %v870
  %872 = vmatmul.f32.gmra.mxu0 %v665
  %v873 = vpop.f32.mrf.mxu0
  %v874 = vadd.f32 %v574, %v873
  %875 = vmatmul.f32.gmra.mxu0 %v668
  %v876 = vpop.f32.mrf.mxu0
  %v877 = vadd.f32 %v574, %v876
  %878 = vmatmul.f32.gmra.mxu0 %v671
  %v879 = vpop.f32.mrf.mxu0
  %v880 = vadd.f32 %v574, %v879
  %881 = vmatmul.f32.gmra.mxu0 %v674
  %v882 = vpop.f32.mrf.mxu0
  %v883 = vadd.f32 %v574, %v882
  %884 = vmatmul.f32.gmra.mxu0 %v677
  %v885 = vpop.f32.mrf.mxu0
  %v886 = vadd.f32 %v574, %v885
  %887 = vmatmul.f32.gmra.mxu0 %v680
  %v888 = vpop.f32.mrf.mxu0
  %v889 = vadd.f32 %v574, %v888
  %890 = vmatmul.f32.gmra.mxu0 %v683
  %v891 = vpop.f32.mrf.mxu0
  %v892 = vadd.f32 %v574, %v891
  %893 = vmatmul.f32.gmra.mxu0 %v686
  %v894 = vpop.f32.mrf.mxu0
  %v895 = vadd.f32 %v574, %v894
  %896 = vmatmul.f32.gmra.mxu0 %v689
  %v897 = vpop.f32.mrf.mxu0
  %v898 = vadd.f32 %v574, %v897
  %899 = vmatmul.f32.gmra.mxu0 %v692
  %v900 = vpop.f32.mrf.mxu0
  %v901 = vadd.f32 %v574, %v900
  %902 = vmatmul.f32.gmra.mxu0 %v695
  %v903 = vpop.f32.mrf.mxu0
  %v904 = vadd.f32 %v574, %v903
  %905 = vmatmul.f32.gmra.mxu0 %v698
  %v906 = vpop.f32.mrf.mxu0
  %v907 = vadd.f32 %v574, %v906
  %908 = vmatmul.f32.gmra.mxu0 %v701
  %v909 = vpop.f32.mrf.mxu0
  %v910 = vadd.f32 %v574, %v909
  %911 = vmatmul.f32.gmra.mxu0 %v704
  %v912 = vpop.f32.mrf.mxu0
  %v913 = vadd.f32 %v574, %v912
  %914 = vmatmul.f32.gmra.mxu0 %v707
  %v915 = vpop.f32.mrf.mxu0
  %v916 = vadd.f32 %v574, %v915
  %917 = vmatmul.f32.gmra.mxu0 %v710
  %v918 = vpop.f32.mrf.mxu0
  %v919 = vadd.f32 %v574, %v918
  %920 = vmatmul.f32.gmra.mxu0 %v713
  %v921 = vpop.f32.mrf.mxu0
  %v922 = vadd.f32 %v574, %v921
  %923 = vmatmul.f32.gmra.mxu0 %v716
  %v924 = vpop.f32.mrf.mxu0
  %v925 = vadd.f32 %v574, %v924
  %926 = vmatmul.f32.gmra.mxu0 %v719
  %v927 = vpop.f32.mrf.mxu0
  %v928 = vadd.f32 %v574, %v927
  %929 = vmatmul.f32.gmra.mxu0 %v722
  %v930 = vpop.f32.mrf.mxu0
  %v931 = vadd.f32 %v574, %v930
  %932 = vmatmul.f32.gmra.mxu0 %v725
  %v933 = vpop.f32.mrf.mxu0
  %v934 = vadd.f32 %v574, %v933
  %935 = vmatmul.f32.gmra.mxu0 %v728
  %v936 = vpop.f32.mrf.mxu0
  %v937 = vadd.f32 %v574, %v936
  %938 = vmatmul.f32.gmra.mxu0 %v731
  %v939 = vpop.f32.mrf.mxu0
  %v940 = vadd.f32 %v574, %v939
  %941 = vmatmul.f32.gmra.mxu0 %v734
  %v942 = vpop.f32.mrf.mxu0
  %v943 = vadd.f32 %v574, %v942
  %944 = vmatmul.f32.gmra.mxu0 %v737
  %v945 = vpop.f32.mrf.mxu0
  %v946 = vadd.f32 %v574, %v945
  %947 = vmatmul.f32.gmra.mxu0 %v740
  %v948 = vpop.f32.mrf.mxu0
  %v949 = vadd.f32 %v574, %v948
  %950 = vmatmul.f32.gmra.mxu0 %v743
  %v951 = vpop.f32.mrf.mxu0
  %v952 = vadd.f32 %v574, %v951
  %953 = vmatmul.f32.gmra.mxu0 %v746
  %v954 = vpop.f32.mrf.mxu0
  %v955 = vadd.f32 %v574, %v954
  %956 = vmatmul.f32.gmra.mxu0 %v749
  %v957 = vpop.f32.mrf.mxu0
  %v958 = vadd.f32 %v574, %v957
  %959 = vmatmul.f32.gmra.mxu0 %v752
  %v960 = vpop.f32.mrf.mxu0
  %v961 = vadd.f32 %v574, %v960
  %962 = vmatmul.f32.gmra.mxu0 %v755
  %v963 = vpop.f32.mrf.mxu0
  %v964 = vadd.f32 %v574, %v963
  %965 = vmatmul.f32.gmra.mxu0 %v758
  %v966 = vpop.f32.mrf.mxu0
  %v967 = vadd.f32 %v574, %v966
  %968 = vmatmul.f32.gmra.mxu0 %v761
  %v969 = vpop.f32.mrf.mxu0
  %v970 = vadd.f32 %v574, %v969
  %971 = vmatmul.f32.gmra.mxu0 %v764
  %v972 = vpop.f32.mrf.mxu0
  %v973 = vadd.f32 %v574, %v972
  %974 = vmatmul.f32.gmra.mxu0 %v767
  %v975 = vpop.f32.mrf.mxu0
  %v976 = vadd.f32 %v574, %v975
  %977 = vdwg.mxu0
  %v978 = vmax.f32 %v787, 0.0
  %v979 = vmax.f32 %v790, 0.0
  %v980 = vmax.f32 %v793, 0.0
  %v981 = vmax.f32 %v796, 0.0
  %v982 = vmax.f32 %v799, 0.0
  %v983 = vmax.f32 %v802, 0.0
  %v984 = vmax.f32 %v805, 0.0
  %v985 = vmax.f32 %v808, 0.0
  %v986 = vmax.f32 %v811, 0.0
  %v987 = vmax.f32 %v814, 0.0
  %v988 = vmax.f32 %v817, 0.0
  %v989 = vmax.f32 %v820, 0.0
  %v990 = vmax.f32 %v823, 0.0
  %v991 = vmax.f32 %v826, 0.0
  %v992 = vmax.f32 %v829, 0.0
  %v993 = vmax.f32 %v832, 0.0
  %v994 = vmax.f32 %v835, 0.0
  %v995 = vmax.f32 %v838, 0.0
  %v996 = vmax.f32 %v841, 0.0
  %v997 = vmax.f32 %v844, 0.0
  %v998 = vmax.f32 %v847, 0.0
  %v999 = vmax.f32 %v850, 0.0
  %v1000 = vmax.f32 %v853, 0.0
  %v1001 = vmax.f32 %v856, 0.0
  %v1002 = vmax.f32 %v859, 0.0
  %v1003 = vmax.f32 %v862, 0.0
  %v1004 = vmax.f32 %v865, 0.0
  %v1005 = vmax.f32 %v868, 0.0
  %v1006 = vmax.f32 %v871, 0.0
  %v1007 = vmax.f32 %v874, 0.0
  %v1008 = vmax.f32 %v877, 0.0
  %v1009 = vmax.f32 %v880, 0.0
  %v1010 = vmax.f32 %v883, 0.0
  %v1011 = vmax.f32 %v886, 0.0
  %v1012 = vmax.f32 %v889, 0.0
  %v1013 = vmax.f32 %v892, 0.0
  %v1014 = vmax.f32 %v895, 0.0
  %v1015 = vmax.f32 %v898, 0.0
  %v1016 = vmax.f32 %v901, 0.0
  %v1017 = vmax.f32 %v904, 0.0
  %v1018 = vmax.f32 %v907, 0.0
  %v1019 = vmax.f32 %v910, 0.0
  %v1020 = vmax.f32 %v913, 0.0
  %v1021 = vmax.f32 %v916, 0.0
  %v1022 = vmax.f32 %v919, 0.0
  %v1023 = vmax.f32 %v922, 0.0
  %v1024 = vmax.f32 %v925, 0.0
  %v1025 = vmax.f32 %v928, 0.0
  %v1026 = vmax.f32 %v931, 0.0
  %v1027 = vmax.f32 %v934, 0.0
  %v1028 = vmax.f32 %v937, 0.0
  %v1029 = vmax.f32 %v940, 0.0
  %v1030 = vmax.f32 %v943, 0.0
  %v1031 = vmax.f32 %v946, 0.0
  %v1032 = vmax.f32 %v949, 0.0
  %v1033 = vmax.f32 %v952, 0.0
  %v1034 = vmax.f32 %v955, 0.0
  %v1035 = vmax.f32 %v958, 0.0
  %v1036 = vmax.f32 %v961, 0.0
  %v1037 = vmax.f32 %v964, 0.0
  %v1038 = vmax.f32 %v967, 0.0
  %v1039 = vmax.f32 %v970, 0.0
  %v1040 = vmax.f32 %v973, 0.0
  %v1041 = vmax.f32 %v976, 0.0
  %v1042 = vld [vmem:[%s5] sm:$0xff]
  %v1043 = vld [vmem:[%s5 + $0x8] sm:$0xff]
  %v1044 = vld [vmem:[%s6] sm:$0x1]
  %v1046 = vperm.slane %v1044, 0
  %v1049 = vsel %vm576, %v978, 0
  %v1052 = vsel %vm576, %v979, 0
  %v1055 = vsel %vm576, %v980, 0
  %v1058 = vsel %vm576, %v981, 0
  %v1061 = vsel %vm576, %v982, 0
  %v1064 = vsel %vm576, %v983, 0
  %v1067 = vsel %vm576, %v984, 0
  %v1070 = vsel %vm576, %v985, 0
  %v1073 = vsel %vm576, %v986, 0
  %v1076 = vsel %vm576, %v987, 0
  %v1079 = vsel %vm576, %v988, 0
  %v1082 = vsel %vm576, %v989, 0
  %v1085 = vsel %vm576, %v990, 0
  %v1088 = vsel %vm576, %v991, 0
  %v1091 = vsel %vm576, %v992, 0
  %v1094 = vsel %vm576, %v993, 0
  %v1097 = vsel %vm576, %v994, 0
  %v1100 = vsel %vm576, %v995, 0
  %v1103 = vsel %vm576, %v996, 0
  %v1106 = vsel %vm576, %v997, 0
  %v1109 = vsel %vm576, %v998, 0
  %v1112 = vsel %vm576, %v999, 0
  %v1115 = vsel %vm576, %v1000, 0
  %v1118 = vsel %vm576, %v1001, 0
  %v1121 = vsel %vm576, %v1002, 0
  %v1124 = vsel %vm576, %v1003, 0
  %v1127 = vsel %vm576, %v1004, 0
  %v1130 = vsel %vm576, %v1005, 0
  %v1133 = vsel %vm576, %v1006, 0
  %v1136 = vsel %vm576, %v1007, 0
  %v1139 = vsel %vm576, %v1008, 0
  %v1142 = vsel %vm576, %v1009, 0
  %v1145 = vsel %vm576, %v1010, 0
  %v1148 = vsel %vm576, %v1011, 0
  %v1151 = vsel %vm576, %v1012, 0
  %v1154 = vsel %vm576, %v1013, 0
  %v1157 = vsel %vm576, %v1014, 0
  %v1160 = vsel %vm576, %v1015, 0
  %v1163 = vsel %vm576, %v1016, 0
  %v1166 = vsel %vm576, %v1017, 0
  %v1169 = vsel %vm576, %v1018, 0
  %v1172 = vsel %vm576, %v1019, 0
  %v1175 = vsel %vm576, %v1020, 0
  %v1178 = vsel %vm576, %v1021, 0
  %v1181 = vsel %vm576, %v1022, 0
  %v1184 = vsel %vm576, %v1023, 0
  %v1187 = vsel %vm576, %v1024, 0
  %v1190 = vsel %vm576, %v1025, 0
  %v1193 = vsel %vm576, %v1026, 0
  %v1196 = vsel %vm576, %v1027, 0
  %v1199 = vsel %vm576, %v1028, 0
  %v1202 = vsel %vm576, %v1029, 0
  %v1205 = vsel %vm576, %v1030, 0
  %v1208 = vsel %vm576, %v1031, 0
  %v1211 = vsel %vm576, %v1032, 0
  %v1214 = vsel %vm576, %v1033, 0
  %v1217 = vsel %vm576, %v1034, 0
  %v1220 = vsel %vm576, %v1035, 0
  %v1223 = vsel %vm576, %v1036, 0
  %v1226 = vsel %vm576, %v1037, 0
  %v1229 = vsel %vm576, %v1038, 0
  %v1232 = vsel %vm576, %v1039, 0
  %v1235 = vsel %vm576, %v1040, 0
  %v1238 = vsel %vm576, %v1041, 0
  %1240 = vmatpush.msra.mxu0 0.0
  %1241 = vmatpush.msra.mxu0 0.0
  %1242 = vmatpush.msra.mxu0 0.0
  %1243 = vmatpush.msra.mxu0 0.0
  %1244 = vmatpush.msra.mxu0 0.0
  %1245 = vmatpush.msra.mxu0 0.0
  %1246 = vmatpush.msra.mxu0 0.0
  %1247 = vmatpush.msra.mxu0 0.0
  %1248 = vmatpush.msra.mxu0 0.0
  %1249 = vmatpush.msra.mxu0 0.0
  %1250 = vmatpush.msra.mxu0 0.0
  %1251 = vmatpush.msra.mxu0 0.0
  %1252 = vmatpush.msra.mxu0 0.0
  %1253 = vmatpush.msra.mxu0 0.0
  %1254 = vmatpush.msra.mxu0 %v1043
  %1255 = vmatpush.msra.mxu0 %v1042
  %1256 = vmatmul.f32.gmra.mxu0 %v1049
  %v1257 = vpop.f32.mrf.mxu0
  %v1258 = vadd.f32 %v1046, %v1257
  %1259 = vmatmul.f32.gmra.mxu0 %v1052
  %v1260 = vpop.f32.mrf.mxu0
  %v1261 = vadd.f32 %v1046, %v1260
  %1262 = vmatmul.f32.gmra.mxu0 %v1055
  %v1263 = vpop.f32.mrf.mxu0
  %v1264 = vadd.f32 %v1046, %v1263
  %1265 = vmatmul.f32.gmra.mxu0 %v1058
  %v1266 = vpop.f32.mrf.mxu0
  %v1267 = vadd.f32 %v1046, %v1266
  %1268 = vmatmul.f32.gmra.mxu0 %v1061
  %v1269 = vpop.f32.mrf.mxu0
  %v1270 = vadd.f32 %v1046, %v1269
  %1271 = vmatmul.f32.gmra.mxu0 %v1064
  %v1272 = vpop.f32.mrf.mxu0
  %v1273 = vadd.f32 %v1046, %v1272
  %1274 = vmatmul.f32.gmra.mxu0 %v1067
  %v1275 = vpop.f32.mrf.mxu0
  %v1276 = vadd.f32 %v1046, %v1275
  %1277 = vmatmul.f32.gmra.mxu0 %v1070
  %v1278 = vpop.f32.mrf.mxu0
  %v1279 = vadd.f32 %v1046, %v1278
  %1280 = vmatmul.f32.gmra.mxu0 %v1073
  %v1281 = vpop.f32.mrf.mxu0
  %v1282 = vadd.f32 %v1046, %v1281
  %1283 = vmatmul.f32.gmra.mxu0 %v1076
  %v1284 = vpop.f32.mrf.mxu0
  %v1285 = vadd.f32 %v1046, %v1284
  %1286 = vmatmul.f32.gmra.mxu0 %v1079
  %v1287 = vpop.f32.mrf.mxu0
  %v1288 = vadd.f32 %v1046, %v1287
  %1289 = vmatmul.f32.gmra.mxu0 %v1082
  %v1290 = vpop.f32.mrf.mxu0
  %v1291 = vadd.f32 %v1046, %v1290
  %1292 = vmatmul.f32.gmra.mxu0 %v1085
  %v1293 = vpop.f32.mrf.mxu0
  %v1294 = vadd.f32 %v1046, %v1293
  %1295 = vmatmul.f32.gmra.mxu0 %v1088
  %v1296 = vpop.f32.mrf.mxu0
  %v1297 = vadd.f32 %v1046, %v1296
  %1298 = vmatmul.f32.gmra.mxu0 %v1091
  %v1299 = vpop.f32.mrf.mxu0
  %v1300 = vadd.f32 %v1046, %v1299
  %1301 = vmatmul.f32.gmra.mxu0 %v1094
  %v1302 = vpop.f32.mrf.mxu0
  %v1303 = vadd.f32 %v1046, %v1302
  %1304 = vmatmul.f32.gmra.mxu0 %v1097
  %v1305 = vpop.f32.mrf.mxu0
  %v1306 = vadd.f32 %v1046, %v1305
  %1307 = vmatmul.f32.gmra.mxu0 %v1100
  %v1308 = vpop.f32.mrf.mxu0
  %v1309 = vadd.f32 %v1046, %v1308
  %1310 = vmatmul.f32.gmra.mxu0 %v1103
  %v1311 = vpop.f32.mrf.mxu0
  %v1312 = vadd.f32 %v1046, %v1311
  %1313 = vmatmul.f32.gmra.mxu0 %v1106
  %v1314 = vpop.f32.mrf.mxu0
  %v1315 = vadd.f32 %v1046, %v1314
  %1316 = vmatmul.f32.gmra.mxu0 %v1109
  %v1317 = vpop.f32.mrf.mxu0
  %v1318 = vadd.f32 %v1046, %v1317
  %1319 = vmatmul.f32.gmra.mxu0 %v1112
  %v1320 = vpop.f32.mrf.mxu0
  %v1321 = vadd.f32 %v1046, %v1320
  %1322 = vmatmul.f32.gmra.mxu0 %v1115
  %v1323 = vpop.f32.mrf.mxu0
  %v1324 = vadd.f32 %v1046, %v1323
  %1325 = vmatmul.f32.gmra.mxu0 %v1118
  %v1326 = vpop.f32.mrf.mxu0
  %v1327 = vadd.f32 %v1046, %v1326
  %1328 = vmatmul.f32.gmra.mxu0 %v1121
  %v1329 = vpop.f32.mrf.mxu0
  %v1330 = vadd.f32 %v1046, %v1329
  %1331 = vmatmul.f32.gmra.mxu0 %v1124
  %v1332 = vpop.f32.mrf.mxu0
  %v1333 = vadd.f32 %v1046, %v1332
  %1334 = vmatmul.f32.gmra.mxu0 %v1127
  %v1335 = vpop.f32.mrf.mxu0
  %v1336 = vadd.f32 %v1046, %v1335
  %1337 = vmatmul.f32.gmra.mxu0 %v1130
  %v1338 = vpop.f32.mrf.mxu0
  %v1339 = vadd.f32 %v1046, %v1338
  %1340 = vmatmul.f32.gmra.mxu0 %v1133
  %v1341 = vpop.f32.mrf.mxu0
  %v1342 = vadd.f32 %v1046, %v1341
  %1343 = vmatmul.f32.gmra.mxu0 %v1136
  %v1344 = vpop.f32.mrf.mxu0
  %v1345 = vadd.f32 %v1046, %v1344
  %1346 = vmatmul.f32.gmra.mxu0 %v1139
  %v1347 = vpop.f32.mrf.mxu0
  %v1348 = vadd.f32 %v1046, %v1347
  %1349 = vmatmul.f32.gmra.mxu0 %v1142
  %v1350 = vpop.f32.mrf.mxu0
  %v1351 = vadd.f32 %v1046, %v1350
  %1352 = vmatmul.f32.gmra.mxu0 %v1145
  %v1353 = vpop.f32.mrf.mxu0
  %v1354 = vadd.f32 %v1046, %v1353
  %1355 = vmatmul.f32.gmra.mxu0 %v1148
  %v1356 = vpop.f32.mrf.mxu0
  %v1357 = vadd.f32 %v1046, %v1356
  %1358 = vmatmul.f32.gmra.mxu0 %v1151
  %v1359 = vpop.f32.mrf.mxu0
  %v1360 = vadd.f32 %v1046, %v1359
  %1361 = vmatmul.f32.gmra.mxu0 %v1154
  %v1362 = vpop.f32.mrf.mxu0
  %v1363 = vadd.f32 %v1046, %v1362
  %1364 = vmatmul.f32.gmra.mxu0 %v1157
  %v1365 = vpop.f32.mrf.mxu0
  %v1366 = vadd.f32 %v1046, %v1365
  %1367 = vmatmul.f32.gmra.mxu0 %v1160
  %v1368 = vpop.f32.mrf.mxu0
  %v1369 = vadd.f32 %v1046, %v1368
  %1370 = vmatmul.f32.gmra.mxu0 %v1163
  %v1371 = vpop.f32.mrf.mxu0
  %v1372 = vadd.f32 %v1046, %v1371
  %1373 = vmatmul.f32.gmra.mxu0 %v1166
  %v1374 = vpop.f32.mrf.mxu0
  %v1375 = vadd.f32 %v1046, %v1374
  %1376 = vmatmul.f32.gmra.mxu0 %v1169
  %v1377 = vpop.f32.mrf.mxu0
  %v1378 = vadd.f32 %v1046, %v1377
  %1379 = vmatmul.f32.gmra.mxu0 %v1172
  %v1380 = vpop.f32.mrf.mxu0
  %v1381 = vadd.f32 %v1046, %v1380
  %1382 = vmatmul.f32.gmra.mxu0 %v1175
  %v1383 = vpop.f32.mrf.mxu0
  %v1384 = vadd.f32 %v1046, %v1383
  %1385 = vmatmul.f32.gmra.mxu0 %v1178
  %v1386 = vpop.f32.mrf.mxu0
  %v1387 = vadd.f32 %v1046, %v1386
  %1388 = vmatmul.f32.gmra.mxu0 %v1181
  %v1389 = vpop.f32.mrf.mxu0
  %v1390 = vadd.f32 %v1046, %v1389
  %1391 = vmatmul.f32.gmra.mxu0 %v1184
  %v1392 = vpop.f32.mrf.mxu0
  %v1393 = vadd.f32 %v1046, %v1392
  %1394 = vmatmul.f32.gmra.mxu0 %v1187
  %v1395 = vpop.f32.mrf.mxu0
  %v1396 = vadd.f32 %v1046, %v1395
  %1397 = vmatmul.f32.gmra.mxu0 %v1190
  %v1398 = vpop.f32.mrf.mxu0
  %v1399 = vadd.f32 %v1046, %v1398
  %1400 = vmatmul.f32.gmra.mxu0 %v1193
  %v1401 = vpop.f32.mrf.mxu0
  %v1402 = vadd.f32 %v1046, %v1401
  %1403 = vmatmul.f32.gmra.mxu0 %v1196
  %v1404 = vpop.f32.mrf.mxu0
  %v1405 = vadd.f32 %v1046, %v1404
  %1406 = vmatmul.f32.gmra.mxu0 %v1199
  %v1407 = vpop.f32.mrf.mxu0
  %v1408 = vadd.f32 %v1046, %v1407
  %1409 = vmatmul.f32.gmra.mxu0 %v1202
  %v1410 = vpop.f32.mrf.mxu0
  %v1411 = vadd.f32 %v1046, %v1410
  %1412 = vmatmul.f32.gmra.mxu0 %v1205
  %v1413 = vpop.f32.mrf.mxu0
  %v1414 = vadd.f32 %v1046, %v1413
  %1415 = vmatmul.f32.gmra.mxu0 %v1208
  %v1416 = vpop.f32.mrf.mxu0
  %v1417 = vadd.f32 %v1046, %v1416
  %1418 = vmatmul.f32.gmra.mxu0 %v1211
  %v1419 = vpop.f32.mrf.mxu0
  %v1420 = vadd.f32 %v1046, %v1419
  %1421 = vmatmul.f32.gmra.mxu0 %v1214
  %v1422 = vpop.f32.mrf.mxu0
  %v1423 = vadd.f32 %v1046, %v1422
  %1424 = vmatmul.f32.gmra.mxu0 %v1217
  %v1425 = vpop.f32.mrf.mxu0
  %v1426 = vadd.f32 %v1046, %v1425
  %1427 = vmatmul.f32.gmra.mxu0 %v1220
  %v1428 = vpop.f32.mrf.mxu0
  %v1429 = vadd.f32 %v1046, %v1428
  %1430 = vmatmul.f32.gmra.mxu0 %v1223
  %v1431 = vpop.f32.mrf.mxu0
  %v1432 = vadd.f32 %v1046, %v1431
  %1433 = vmatmul.f32.gmra.mxu0 %v1226
  %v1434 = vpop.f32.mrf.mxu0
  %v1435 = vadd.f32 %v1046, %v1434
  %1436 = vmatmul.f32.gmra.mxu0 %v1229
  %v1437 = vpop.f32.mrf.mxu0
  %v1438 = vadd.f32 %v1046, %v1437
  %1439 = vmatmul.f32.gmra.mxu0 %v1232
  %v1440 = vpop.f32.mrf.mxu0
  %v1441 = vadd.f32 %v1046, %v1440
  %1442 = vmatmul.f32.gmra.mxu0 %v1235
  %v1443 = vpop.f32.mrf.mxu0
  %v1444 = vadd.f32 %v1046, %v1443
  %1445 = vmatmul.f32.gmra.mxu0 %v1238
  %v1446 = vpop.f32.mrf.mxu0
  %v1447 = vadd.f32 %v1046, %v1446
  %1448 = vdwg.mxu0
  %v1449 = vmax.f32 %v1258, 0.0
  %v1450 = vmax.f32 %v1261, 0.0
  %v1451 = vmax.f32 %v1264, 0.0
  %v1452 = vmax.f32 %v1267, 0.0
  %v1453 = vmax.f32 %v1270, 0.0
  %v1454 = vmax.f32 %v1273, 0.0
  %v1455 = vmax.f32 %v1276, 0.0
  %v1456 = vmax.f32 %v1279, 0.0
  %v1457 = vmax.f32 %v1282, 0.0
  %v1458 = vmax.f32 %v1285, 0.0
  %v1459 = vmax.f32 %v1288, 0.0
  %v1460 = vmax.f32 %v1291, 0.0
  %v1461 = vmax.f32 %v1294, 0.0
  %v1462 = vmax.f32 %v1297, 0.0
  %v1463 = vmax.f32 %v1300, 0.0
  %v1464 = vmax.f32 %v1303, 0.0
  %v1465 = vmax.f32 %v1306, 0.0
  %v1466 = vmax.f32 %v1309, 0.0
  %v1467 = vmax.f32 %v1312, 0.0
  %v1468 = vmax.f32 %v1315, 0.0
  %v1469 = vmax.f32 %v1318, 0.0
  %v1470 = vmax.f32 %v1321, 0.0
  %v1471 = vmax.f32 %v1324, 0.0
  %v1472 = vmax.f32 %v1327, 0.0
  %v1473 = vmax.f32 %v1330, 0.0
  %v1474 = vmax.f32 %v1333, 0.0
  %v1475 = vmax.f32 %v1336, 0.0
  %v1476 = vmax.f32 %v1339, 0.0
  %v1477 = vmax.f32 %v1342, 0.0
  %v1478 = vmax.f32 %v1345, 0.0
  %v1479 = vmax.f32 %v1348, 0.0
  %v1480 = vmax.f32 %v1351, 0.0
  %v1481 = vmax.f32 %v1354, 0.0
  %v1482 = vmax.f32 %v1357, 0.0
  %v1483 = vmax.f32 %v1360, 0.0
  %v1484 = vmax.f32 %v1363, 0.0
  %v1485 = vmax.f32 %v1366, 0.0
  %v1486 = vmax.f32 %v1369, 0.0
  %v1487 = vmax.f32 %v1372, 0.0
  %v1488 = vmax.f32 %v1375, 0.0
  %v1489 = vmax.f32 %v1378, 0.0
  %v1490 = vmax.f32 %v1381, 0.0
  %v1491 = vmax.f32 %v1384, 0.0
  %v1492 = vmax.f32 %v1387, 0.0
  %v1493 = vmax.f32 %v1390, 0.0
  %v1494 = vmax.f32 %v1393, 0.0
  %v1495 = vmax.f32 %v1396, 0.0
  %v1496 = vmax.f32 %v1399, 0.0
  %v1497 = vmax.f32 %v1402, 0.0
  %v1498 = vmax.f32 %v1405, 0.0
  %v1499 = vmax.f32 %v1408, 0.0
  %v1500 = vmax.f32 %v1411, 0.0
  %v1501 = vmax.f32 %v1414, 0.0
  %v1502 = vmax.f32 %v1417, 0.0
  %v1503 = vmax.f32 %v1420, 0.0
  %v1504 = vmax.f32 %v1423, 0.0
  %v1505 = vmax.f32 %v1426, 0.0
  %v1506 = vmax.f32 %v1429, 0.0
  %v1507 = vmax.f32 %v1432, 0.0
  %v1508 = vmax.f32 %v1435, 0.0
  %v1509 = vmax.f32 %v1438, 0.0
  %v1510 = vmax.f32 %v1441, 0.0
  %v1511 = vmax.f32 %v1444, 0.0
  %v1512 = vmax.f32 %v1447, 0.0
  %v1513 = vld [vmem:[%s7] sm:$0xff]
  %v1514 = vld [vmem:[%s7 + $0x8] sm:$0xff]
  %v1515 = vld [vmem:[%s8] sm:$0x1]
  %v1517 = vperm.slane %v1515, 0
  %v1520 = vsel %vm576, %v1449, 0
  %v1523 = vsel %vm576, %v1450, 0
  %v1526 = vsel %vm576, %v1451, 0
  %v1529 = vsel %vm576, %v1452, 0
  %v1532 = vsel %vm576, %v1453, 0
  %v1535 = vsel %vm576, %v1454, 0
  %v1538 = vsel %vm576, %v1455, 0
  %v1541 = vsel %vm576, %v1456, 0
  %v1544 = vsel %vm576, %v1457, 0
  %v1547 = vsel %vm576, %v1458, 0
  %v1550 = vsel %vm576, %v1459, 0
  %v1553 = vsel %vm576, %v1460, 0
  %v1556 = vsel %vm576, %v1461, 0
  %v1559 = vsel %vm576, %v1462, 0
  %v1562 = vsel %vm576, %v1463, 0
  %v1565 = vsel %vm576, %v1464, 0
  %v1568 = vsel %vm576, %v1465, 0
  %v1571 = vsel %vm576, %v1466, 0
  %v1574 = vsel %vm576, %v1467, 0
  %v1577 = vsel %vm576, %v1468, 0
  %v1580 = vsel %vm576, %v1469, 0
  %v1583 = vsel %vm576, %v1470, 0
  %v1586 = vsel %vm576, %v1471, 0
  %v1589 = vsel %vm576, %v1472, 0
  %v1592 = vsel %vm576, %v1473, 0
  %v1595 = vsel %vm576, %v1474, 0
  %v1598 = vsel %vm576, %v1475, 0
  %v1601 = vsel %vm576, %v1476, 0
  %v1604 = vsel %vm576, %v1477, 0
  %v1607 = vsel %vm576, %v1478, 0
  %v1610 = vsel %vm576, %v1479, 0
  %v1613 = vsel %vm576, %v1480, 0
  %v1616 = vsel %vm576, %v1481, 0
  %v1619 = vsel %vm576, %v1482, 0
  %v1622 = vsel %vm576, %v1483, 0
  %v1625 = vsel %vm576, %v1484, 0
  %v1628 = vsel %vm576, %v1485, 0
  %v1631 = vsel %vm576, %v1486, 0
  %v1634 = vsel %vm576, %v1487, 0
  %v1637 = vsel %vm576, %v1488, 0
  %v1640 = vsel %vm576, %v1489, 0
  %v1643 = vsel %vm576, %v1490, 0
  %v1646 = vsel %vm576, %v1491, 0
  %v1649 = vsel %vm576, %v1492, 0
  %v1652 = vsel %vm576, %v1493, 0
  %v1655 = vsel %vm576, %v1494, 0
  %v1658 = vsel %vm576, %v1495, 0
  %v1661 = vsel %vm576, %v1496, 0
  %v1664 = vsel %vm576, %v1497, 0
  %v1667 = vsel %vm576, %v1498, 0
  %v1670 = vsel %vm576, %v1499, 0
  %v1673 = vsel %vm576, %v1500, 0
  %v1676 = vsel %vm576, %v1501, 0
  %v1679 = vsel %vm576, %v1502, 0
  %v1682 = vsel %vm576, %v1503, 0
  %v1685 = vsel %vm576, %v1504, 0
  %v1688 = vsel %vm576, %v1505, 0
  %v1691 = vsel %vm576, %v1506, 0
  %v1694 = vsel %vm576, %v1507, 0
  %v1697 = vsel %vm576, %v1508, 0
  %v1700 = vsel %vm576, %v1509, 0
  %v1703 = vsel %vm576, %v1510, 0
  %v1706 = vsel %vm576, %v1511, 0
  %v1709 = vsel %vm576, %v1512, 0
  %1711 = vmatpush.msra.mxu0 0.0
  %1712 = vmatpush.msra.mxu0 0.0
  %1713 = vmatpush.msra.mxu0 0.0
  %1714 = vmatpush.msra.mxu0 0.0
  %1715 = vmatpush.msra.mxu0 0.0
  %1716 = vmatpush.msra.mxu0 0.0
  %1717 = vmatpush.msra.mxu0 0.0
  %1718 = vmatpush.msra.mxu0 0.0
  %1719 = vmatpush.msra.mxu0 0.0
  %1720 = vmatpush.msra.mxu0 0.0
  %1721 = vmatpush.msra.mxu0 0.0
  %1722 = vmatpush.msra.mxu0 0.0
  %1723 = vmatpush.msra.mxu0 0.0
  %1724 = vmatpush.msra.mxu0 0.0
  %1725 = vmatpush.msra.mxu0 %v1514
  %1726 = vmatpush.msra.mxu0 %v1513
  %1727 = vmatmul.f32.gmra.mxu0 %v1520
  %v1728 = vpop.f32.mrf.mxu0
  %v1729 = vadd.f32 %v1517, %v1728
  %1730 = vmatmul.f32.gmra.mxu0 %v1523
  %v1731 = vpop.f32.mrf.mxu0
  %v1732 = vadd.f32 %v1517, %v1731
  %1733 = vmatmul.f32.gmra.mxu0 %v1526
  %v1734 = vpop.f32.mrf.mxu0
  %v1735 = vadd.f32 %v1517, %v1734
  %1736 = vmatmul.f32.gmra.mxu0 %v1529
  %v1737 = vpop.f32.mrf.mxu0
  %v1738 = vadd.f32 %v1517, %v1737
  %1739 = vmatmul.f32.gmra.mxu0 %v1532
  %v1740 = vpop.f32.mrf.mxu0
  %v1741 = vadd.f32 %v1517, %v1740
  %1742 = vmatmul.f32.gmra.mxu0 %v1535
  %v1743 = vpop.f32.mrf.mxu0
  %v1744 = vadd.f32 %v1517, %v1743
  %1745 = vmatmul.f32.gmra.mxu0 %v1538
  %v1746 = vpop.f32.mrf.mxu0
  %v1747 = vadd.f32 %v1517, %v1746
  %1748 = vmatmul.f32.gmra.mxu0 %v1541
  %v1749 = vpop.f32.mrf.mxu0
  %v1750 = vadd.f32 %v1517, %v1749
  %1751 = vmatmul.f32.gmra.mxu0 %v1544
  %v1752 = vpop.f32.mrf.mxu0
  %v1753 = vadd.f32 %v1517, %v1752
  %1754 = vmatmul.f32.gmra.mxu0 %v1547
  %v1755 = vpop.f32.mrf.mxu0
  %v1756 = vadd.f32 %v1517, %v1755
  %1757 = vmatmul.f32.gmra.mxu0 %v1550
  %v1758 = vpop.f32.mrf.mxu0
  %v1759 = vadd.f32 %v1517, %v1758
  %1760 = vmatmul.f32.gmra.mxu0 %v1553
  %v1761 = vpop.f32.mrf.mxu0
  %v1762 = vadd.f32 %v1517, %v1761
  %1763 = vmatmul.f32.gmra.mxu0 %v1556
  %v1764 = vpop.f32.mrf.mxu0
  %v1765 = vadd.f32 %v1517, %v1764
  %1766 = vmatmul.f32.gmra.mxu0 %v1559
  %v1767 = vpop.f32.mrf.mxu0
  %v1768 = vadd.f32 %v1517, %v1767
  %1769 = vmatmul.f32.gmra.mxu0 %v1562
  %v1770 = vpop.f32.mrf.mxu0
  %v1771 = vadd.f32 %v1517, %v1770
  %1772 = vmatmul.f32.gmra.mxu0 %v1565
  %v1773 = vpop.f32.mrf.mxu0
  %v1774 = vadd.f32 %v1517, %v1773
  %1775 = vmatmul.f32.gmra.mxu0 %v1568
  %v1776 = vpop.f32.mrf.mxu0
  %v1777 = vadd.f32 %v1517, %v1776
  %1778 = vmatmul.f32.gmra.mxu0 %v1571
  %v1779 = vpop.f32.mrf.mxu0
  %v1780 = vadd.f32 %v1517, %v1779
  %1781 = vmatmul.f32.gmra.mxu0 %v1574
  %v1782 = vpop.f32.mrf.mxu0
  %v1783 = vadd.f32 %v1517, %v1782
  %1784 = vmatmul.f32.gmra.mxu0 %v1577
  %v1785 = vpop.f32.mrf.mxu0
  %v1786 = vadd.f32 %v1517, %v1785
  %1787 = vmatmul.f32.gmra.mxu0 %v1580
  %v1788 = vpop.f32.mrf.mxu0
  %v1789 = vadd.f32 %v1517, %v1788
  %1790 = vmatmul.f32.gmra.mxu0 %v1583
  %v1791 = vpop.f32.mrf.mxu0
  %v1792 = vadd.f32 %v1517, %v1791
  %1793 = vmatmul.f32.gmra.mxu0 %v1586
  %v1794 = vpop.f32.mrf.mxu0
  %v1795 = vadd.f32 %v1517, %v1794
  %1796 = vmatmul.f32.gmra.mxu0 %v1589
  %v1797 = vpop.f32.mrf.mxu0
  %v1798 = vadd.f32 %v1517, %v1797
  %1799 = vmatmul.f32.gmra.mxu0 %v1592
  %v1800 = vpop.f32.mrf.mxu0
  %v1801 = vadd.f32 %v1517, %v1800
  %1802 = vmatmul.f32.gmra.mxu0 %v1595
  %v1803 = vpop.f32.mrf.mxu0
  %v1804 = vadd.f32 %v1517, %v1803
  %1805 = vmatmul.f32.gmra.mxu0 %v1598
  %v1806 = vpop.f32.mrf.mxu0
  %v1807 = vadd.f32 %v1517, %v1806
  %1808 = vmatmul.f32.gmra.mxu0 %v1601
  %v1809 = vpop.f32.mrf.mxu0
  %v1810 = vadd.f32 %v1517, %v1809
  %1811 = vmatmul.f32.gmra.mxu0 %v1604
  %v1812 = vpop.f32.mrf.mxu0
  %v1813 = vadd.f32 %v1517, %v1812
  %1814 = vmatmul.f32.gmra.mxu0 %v1607
  %v1815 = vpop.f32.mrf.mxu0
  %v1816 = vadd.f32 %v1517, %v1815
  %1817 = vmatmul.f32.gmra.mxu0 %v1610
  %v1818 = vpop.f32.mrf.mxu0
  %v1819 = vadd.f32 %v1517, %v1818
  %1820 = vmatmul.f32.gmra.mxu0 %v1613
  %v1821 = vpop.f32.mrf.mxu0
  %v1822 = vadd.f32 %v1517, %v1821
  %1823 = vmatmul.f32.gmra.mxu0 %v1616
  %v1824 = vpop.f32.mrf.mxu0
  %v1825 = vadd.f32 %v1517, %v1824
  %1826 = vmatmul.f32.gmra.mxu0 %v1619
  %v1827 = vpop.f32.mrf.mxu0
  %v1828 = vadd.f32 %v1517, %v1827
  %1829 = vmatmul.f32.gmra.mxu0 %v1622
  %v1830 = vpop.f32.mrf.mxu0
  %v1831 = vadd.f32 %v1517, %v1830
  %1832 = vmatmul.f32.gmra.mxu0 %v1625
  %v1833 = vpop.f32.mrf.mxu0
  %v1834 = vadd.f32 %v1517, %v1833
  %1835 = vmatmul.f32.gmra.mxu0 %v1628
  %v1836 = vpop.f32.mrf.mxu0
  %v1837 = vadd.f32 %v1517, %v1836
  %1838 = vmatmul.f32.gmra.mxu0 %v1631
  %v1839 = vpop.f32.mrf.mxu0
  %v1840 = vadd.f32 %v1517, %v1839
  %1841 = vmatmul.f32.gmra.mxu0 %v1634
  %v1842 = vpop.f32.mrf.mxu0
  %v1843 = vadd.f32 %v1517, %v1842
  %1844 = vmatmul.f32.gmra.mxu0 %v1637
  %v1845 = vpop.f32.mrf.mxu0
  %v1846 = vadd.f32 %v1517, %v1845
  %1847 = vmatmul.f32.gmra.mxu0 %v1640
  %v1848 = vpop.f32.mrf.mxu0
  %v1849 = vadd.f32 %v1517, %v1848
  %1850 = vmatmul.f32.gmra.mxu0 %v1643
  %v1851 = vpop.f32.mrf.mxu0
  %v1852 = vadd.f32 %v1517, %v1851
  %1853 = vmatmul.f32.gmra.mxu0 %v1646
  %v1854 = vpop.f32.mrf.mxu0
  %v1855 = vadd.f32 %v1517, %v1854
  %1856 = vmatmul.f32.gmra.mxu0 %v1649
  %v1857 = vpop.f32.mrf.mxu0
  %v1858 = vadd.f32 %v1517, %v1857
  %1859 = vmatmul.f32.gmra.mxu0 %v1652
  %v1860 = vpop.f32.mrf.mxu0
  %v1861 = vadd.f32 %v1517, %v1860
  %1862 = vmatmul.f32.gmra.mxu0 %v1655
  %v1863 = vpop.f32.mrf.mxu0
  %v1864 = vadd.f32 %v1517, %v1863
  %1865 = vmatmul.f32.gmra.mxu0 %v1658
  %v1866 = vpop.f32.mrf.mxu0
  %v1867 = vadd.f32 %v1517, %v1866
  %1868 = vmatmul.f32.gmra.mxu0 %v1661
  %v1869 = vpop.f32.mrf.mxu0
  %v1870 = vadd.f32 %v1517, %v1869
  %1871 = vmatmul.f32.gmra.mxu0 %v1664
  %v1872 = vpop.f32.mrf.mxu0
  %v1873 = vadd.f32 %v1517, %v1872
  %1874 = vmatmul.f32.gmra.mxu0 %v1667
  %v1875 = vpop.f32.mrf.mxu0
  %v1876 = vadd.f32 %v1517, %v1875
  %1877 = vmatmul.f32.gmra.mxu0 %v1670
  %v1878 = vpop.f32.mrf.mxu0
  %v1879 = vadd.f32 %v1517, %v1878
  %1880 = vmatmul.f32.gmra.mxu0 %v1673
  %v1881 = vpop.f32.mrf.mxu0
  %v1882 = vadd.f32 %v1517, %v1881
  %1883 = vmatmul.f32.gmra.mxu0 %v1676
  %v1884 = vpop.f32.mrf.mxu0
  %v1885 = vadd.f32 %v1517, %v1884
  %1886 = vmatmul.f32.gmra.mxu0 %v1679
  %v1887 = vpop.f32.mrf.mxu0
  %v1888 = vadd.f32 %v1517, %v1887
  %1889 = vmatmul.f32.gmra.mxu0 %v1682
  %v1890 = vpop.f32.mrf.mxu0
  %v1891 = vadd.f32 %v1517, %v1890
  %1892 = vmatmul.f32.gmra.mxu0 %v1685
  %v1893 = vpop.f32.mrf.mxu0
  %v1894 = vadd.f32 %v1517, %v1893
  %1895 = vmatmul.f32.gmra.mxu0 %v1688
  %v1896 = vpop.f32.mrf.mxu0
  %v1897 = vadd.f32 %v1517, %v1896
  %1898 = vmatmul.f32.gmra.mxu0 %v1691
  %v1899 = vpop.f32.mrf.mxu0
  %v1900 = vadd.f32 %v1517, %v1899
  %1901 = vmatmul.f32.gmra.mxu0 %v1694
  %v1902 = vpop.f32.mrf.mxu0
  %v1903 = vadd.f32 %v1517, %v1902
  %1904 = vmatmul.f32.gmra.mxu0 %v1697
  %v1905 = vpop.f32.mrf.mxu0
  %v1906 = vadd.f32 %v1517, %v1905
  %1907 = vmatmul.f32.gmra.mxu0 %v1700
  %v1908 = vpop.f32.mrf.mxu0
  %v1909 = vadd.f32 %v1517, %v1908
  %1910 = vmatmul.f32.gmra.mxu0 %v1703
  %v1911 = vpop.f32.mrf.mxu0
  %v1912 = vadd.f32 %v1517, %v1911
  %1913 = vmatmul.f32.gmra.mxu0 %v1706
  %v1914 = vpop.f32.mrf.mxu0
  %v1915 = vadd.f32 %v1517, %v1914
  %1916 = vmatmul.f32.gmra.mxu0 %v1709
  %v1917 = vpop.f32.mrf.mxu0
  %v1918 = vadd.f32 %v1517, %v1917
  %1919 = vdwg.mxu0
  %vm1920 = vcmask 31744
  %1921 = vst.msk [vmem:[%s9] sm:$0xff] %vm1920, %v1729
  %1922 = vst.msk [vmem:[%s9 + $0x8] sm:$0xff] %vm1920, %v1732
  %1923 = vst.msk [vmem:[%s9 + $0x10] sm:$0xff] %vm1920, %v1735
  %1924 = vst.msk [vmem:[%s9 + $0x18] sm:$0xff] %vm1920, %v1738
  %1925 = vst.msk [vmem:[%s9 + $0x20] sm:$0xff] %vm1920, %v1741
  %1926 = vst.msk [vmem:[%s9 + $0x28] sm:$0xff] %vm1920, %v1744
  %1927 = vst.msk [vmem:[%s9 + $0x30] sm:$0xff] %vm1920, %v1747
  %1928 = vst.msk [vmem:[%s9 + $0x38] sm:$0xff] %vm1920, %v1750
  %1929 = vst.msk [vmem:[%s9 + $0x40] sm:$0xff] %vm1920, %v1753
  %1930 = vst.msk [vmem:[%s9 + $0x48] sm:$0xff] %vm1920, %v1756
  %1931 = vst.msk [vmem:[%s9 + $0x50] sm:$0xff] %vm1920, %v1759
  %1932 = vst.msk [vmem:[%s9 + $0x58] sm:$0xff] %vm1920, %v1762
  %1933 = vst.msk [vmem:[%s9 + $0x60] sm:$0xff] %vm1920, %v1765
  %1934 = vst.msk [vmem:[%s9 + $0x68] sm:$0xff] %vm1920, %v1768
  %1935 = vst.msk [vmem:[%s9 + $0x70] sm:$0xff] %vm1920, %v1771
  %1936 = vst.msk [vmem:[%s9 + $0x78] sm:$0xff] %vm1920, %v1774
  %1937 = vst.msk [vmem:[%s9 + $0x80] sm:$0xff] %vm1920, %v1777
  %1938 = vst.msk [vmem:[%s9 + $0x88] sm:$0xff] %vm1920, %v1780
  %1939 = vst.msk [vmem:[%s9 + $0x90] sm:$0xff] %vm1920, %v1783
  %1940 = vst.msk [vmem:[%s9 + $0x98] sm:$0xff] %vm1920, %v1786
  %1941 = vst.msk [vmem:[%s9 + $0xa0] sm:$0xff] %vm1920, %v1789
  %1942 = vst.msk [vmem:[%s9 + $0xa8] sm:$0xff] %vm1920, %v1792
  %1943 = vst.msk [vmem:[%s9 + $0xb0] sm:$0xff] %vm1920, %v1795
  %1944 = vst.msk [vmem:[%s9 + $0xb8] sm:$0xff] %vm1920, %v1798
  %1945 = vst.msk [vmem:[%s9 + $0xc0] sm:$0xff] %vm1920, %v1801
  %1946 = vst.msk [vmem:[%s9 + $0xc8] sm:$0xff] %vm1920, %v1804
  %1947 = vst.msk [vmem:[%s9 + $0xd0] sm:$0xff] %vm1920, %v1807
  %1948 = vst.msk [vmem:[%s9 + $0xd8] sm:$0xff] %vm1920, %v1810
  %1949 = vst.msk [vmem:[%s9 + $0xe0] sm:$0xff] %vm1920, %v1813
  %1950 = vst.msk [vmem:[%s9 + $0xe8] sm:$0xff] %vm1920, %v1816
  %1951 = vst.msk [vmem:[%s9 + $0xf0] sm:$0xff] %vm1920, %v1819
  %1952 = vst.msk [vmem:[%s9 + $0xf8] sm:$0xff] %vm1920, %v1822
  %1953 = vst.msk [vmem:[%s9 + $0x100] sm:$0xff] %vm1920, %v1825
  %1954 = vst.msk [vmem:[%s9 + $0x108] sm:$0xff] %vm1920, %v1828
  %1955 = vst.msk [vmem:[%s9 + $0x110] sm:$0xff] %vm1920, %v1831
  %1956 = vst.msk [vmem:[%s9 + $0x118] sm:$0xff] %vm1920, %v1834
  %1957 = vst.msk [vmem:[%s9 + $0x120] sm:$0xff] %vm1920, %v1837
  %1958 = vst.msk [vmem:[%s9 + $0x128] sm:$0xff] %vm1920, %v1840
  %1959 = vst.msk [vmem:[%s9 + $0x130] sm:$0xff] %vm1920, %v1843
  %1960 = vst.msk [vmem:[%s9 + $0x138] sm:$0xff] %vm1920, %v1846
  %1961 = vst.msk [vmem:[%s9 + $0x140] sm:$0xff] %vm1920, %v1849
  %1962 = vst.msk [vmem:[%s9 + $0x148] sm:$0xff] %vm1920, %v1852
  %1963 = vst.msk [vmem:[%s9 + $0x150] sm:$0xff] %vm1920, %v1855
  %1964 = vst.msk [vmem:[%s9 + $0x158] sm:$0xff] %vm1920, %v1858
  %1965 = vst.msk [vmem:[%s9 + $0x160] sm:$0xff] %vm1920, %v1861
  %1966 = vst.msk [vmem:[%s9 + $0x168] sm:$0xff] %vm1920, %v1864
  %1967 = vst.msk [vmem:[%s9 + $0x170] sm:$0xff] %vm1920, %v1867
  %1968 = vst.msk [vmem:[%s9 + $0x178] sm:$0xff] %vm1920, %v1870
  %1969 = vst.msk [vmem:[%s9 + $0x180] sm:$0xff] %vm1920, %v1873
  %1970 = vst.msk [vmem:[%s9 + $0x188] sm:$0xff] %vm1920, %v1876
  %1971 = vst.msk [vmem:[%s9 + $0x190] sm:$0xff] %vm1920, %v1879
  %1972 = vst.msk [vmem:[%s9 + $0x198] sm:$0xff] %vm1920, %v1882
  %1973 = vst.msk [vmem:[%s9 + $0x1a0] sm:$0xff] %vm1920, %v1885
  %1974 = vst.msk [vmem:[%s9 + $0x1a8] sm:$0xff] %vm1920, %v1888
  %1975 = vst.msk [vmem:[%s9 + $0x1b0] sm:$0xff] %vm1920, %v1891
  %1976 = vst.msk [vmem:[%s9 + $0x1b8] sm:$0xff] %vm1920, %v1894
  %1977 = vst.msk [vmem:[%s9 + $0x1c0] sm:$0xff] %vm1920, %v1897
  %1978 = vst.msk [vmem:[%s9 + $0x1c8] sm:$0xff] %vm1920, %v1900
  %1979 = vst.msk [vmem:[%s9 + $0x1d0] sm:$0xff] %vm1920, %v1903
  %1980 = vst.msk [vmem:[%s9 + $0x1d8] sm:$0xff] %vm1920, %v1906
  %1981 = vst.msk [vmem:[%s9 + $0x1e0] sm:$0xff] %vm1920, %v1909
  %1982 = vst.msk [vmem:[%s9 + $0x1e8] sm:$0xff] %vm1920, %v1912
  %1983 = vst.msk [vmem:[%s9 + $0x1f0] sm:$0xff] %vm1920, %v1915
  %1984 = vst.msk [vmem:[%s9 + $0x1f8] sm:$0xff] %vm1920, %v1918
  // Predicated region
  $region38: #{tpu_custom_call.1} parent=0 // pred_check
    _
  $region39: #{tpu_custom_call.1} parent=0 // pred_check_branch
    %1986 = sbr.rel (0) target = $region41
  $region40: #{tpu_custom_call.1} parent=0 // pred_region
    _
  $region41: #{tpu_custom_call.1} parent=0 // pred_fallthru
    _
  // Predicated region
  $region42: #{tpu_custom_call.1} parent=0 // pred_check
    _
  $region43: #{tpu_custom_call.1} parent=0 // pred_check_branch
    %1988 = sbr.rel (0) target = $region45
  $region44: #{tpu_custom_call.1} parent=0 // pred_region
    _
  $region45: #{tpu_custom_call.1} parent=0 // pred_fallthru
    _

</llo_original>
